<compile_context>
chip_gen: v5e
topology: v5e:2x2
jax: 0.10.0
libtpu: 0.0.40
codegen_flags: <defaults>
</compile_context>

<pallas_src>
import functools

import jax
import jax.numpy as jnp
import numpy as np
from jax.experimental import pallas as pl
from jax.experimental.pallas import tpu as pltpu


def _subpixel_conv_kernel(x_ref, w_ref, b_ref, o_ref, xp_ref, patch_ref, *,
                          nF, H, W, C_in, C_out):
    """One grid step == nF original-resolution frames.

    x_ref:     (nF, H, W, C_in)       original (NOT upsampled) NHWC frames
    w_ref:     (9*C_in, 4*C_out)      folded phase filters; rows=(dy,dx,ci), cols=(py,px,co)
    b_ref:     (1, 4*C_out)           bias tiled over the 4 phases
    o_ref:     (nF, H, W, 4*C_out)    phase-major output
    xp_ref:    (nF, H+2, W+2, C_in)   VMEM scratch: zero-padded frames
    patch_ref: (nF, H, W, 9*C_in)     VMEM scratch: im2col patches
    """
    # Spatial zero-pad entirely in VMEM (no HBM pass for the pad).
    xp_ref[...] = jnp.zeros_like(xp_ref)
    xp_ref[:, 1:H + 1, 1:W + 1, :] = x_ref[...]

    # im2col: 9 shifted windows packed along the channel (lane) axis.
    for t in range(9):
        dy, dx = divmod(t, 3)
        patch_ref[:, :, :, t * C_in:(t + 1) * C_in] = \
            xp_ref[:, dy:dy + H, dx:dx + W, :]

    patches = patch_ref[...].reshape(nF * H * W, 9 * C_in)

    # Single MXU matmul computes all 4 sub-pixel phases at once (f32 accum).
    acc = jnp.dot(patches, w_ref[...], preferred_element_type=jnp.float32)
    acc = acc + b_ref[...].astype(jnp.float32)

    o_ref[...] = acc.reshape(nF, H, W, 4 * C_out).astype(o_ref.dtype)


def _pick_num_frames(BT, H, W, C_in, C_out, dtype_bytes, vmem_budget=6 << 20):
    """Largest divisor of BT whose per-step VMEM footprint fits the budget,
    keeping >= 2 grid steps when possible (v7x has 2 TensorCores per chip)."""
    per_frame = (
        2 * H * W * C_in * dtype_bytes                  # input block (double-buffered)
        + (H + 2) * (W + 2) * C_in * dtype_bytes        # padded scratch
        + 9 * H * W * C_in * dtype_bytes                # im2col scratch
        + 4 * H * W * C_out * 4                         # f32 accumulator
        + 2 * 4 * H * W * C_out * dtype_bytes           # output block (double-buffered)
    )
    max_nf = max(1, int(vmem_budget // per_frame))
    best = 1
    for d in range(1, BT + 1):
        if BT % d == 0 and d <= max_nf and (BT // d >= 2 or BT == 1):
            best = d
    return best


def spatial_upsample2x(x, weight, bias):
    """x: (B, C_in, T, H, W); weight: (C_out, C_in, 1, 3, 3); bias: (C_out,).
    Returns (B, C_out, T, 2H, 2W).  Works for f32 or bf16 inputs (f32 accumulation)."""
    B, C_in, T, H, W = x.shape
    C_out = weight.shape[0]
    BT = B * T

    # Channels-last frames at ORIGINAL resolution (the 4x upsampled tensor is
    # never materialized).
    frames = jnp.transpose(x, (0, 2, 3, 4, 1)).reshape(BT, H, W, C_in)

    # Fold nearest-2x upsample + 3x3 conv into 4 phase filters, packed into one
    # (9*C_in, 4*C_out) matrix.  S[p, d, k] = 1 iff 3x3 tap k of output phase p
    # reads padded-original offset d (derived from x_up[u] = x[u // 2], pad 1).
    w3 = jnp.transpose(weight[:, :, 0], (2, 3, 1, 0))               # (3,3,C_in,C_out)
    S = jnp.array([[[1, 0, 0], [0, 1, 1], [0, 0, 0]],
                   [[0, 0, 0], [1, 1, 0], [0, 0, 1]]], w3.dtype)    # (2,3,3) [p,d,k]
    wbig = jnp.einsum('pdk,qel,klio->deipqo', S, S, w3)             # (3,3,Ci,2,2,Co)
    wbig = wbig.reshape(9 * C_in, 4 * C_out)
    b4 = jnp.tile(bias, 4).reshape(1, 4 * C_out)

    nF = _pick_num_frames(BT, H, W, C_in, C_out, x.dtype.itemsize)
    kernel = functools.partial(_subpixel_conv_kernel, nF=nF, H=H, W=W,
                               C_in=C_in, C_out=C_out)

    out = pl.pallas_call(
        kernel,
        out_shape=jax.ShapeDtypeStruct((BT, H, W, 4 * C_out), x.dtype),
        grid=(BT // nF,),
        in_specs=[
            pl.BlockSpec((nF, H, W, C_in), lambda i: (i, 0, 0, 0)),
            pl.BlockSpec((9 * C_in, 4 * C_out), lambda i: (0, 0)),
            pl.BlockSpec((1, 4 * C_out), lambda i: (0, 0)),
        ],
        out_specs=pl.BlockSpec((nF, H, W, 4 * C_out), lambda i: (i, 0, 0, 0)),
        scratch_shapes=[
            pltpu.VMEM((nF, H + 2, W + 2, C_in), x.dtype),
            pltpu.VMEM((nF, H, W, 9 * C_in), x.dtype),
        ],
        compiler_params=pltpu.CompilerParams(
            dimension_semantics=("parallel",)),
    )(frames, wbig, b4)

    # (BT, H, W, py*px*C_out) -> (B, C_out, T, 2H, 2W); the sub-pixel shuffle is
    # folded into the single transpose that is needed anyway to return NCTHW.
    out = out.reshape(B, T, H, W, 2, 2, C_out)
    out = jnp.transpose(out, (0, 6, 1, 2, 4, 3, 5))
    return out.reshape(B, C_out, T, 2 * H, 2 * W)


def _reference(x, weight, bias):
    """Pure-JAX reference: nearest 2x upsample + Conv3d(k=(1,3,3), pad=(0,1,1))."""
    x_up = jnp.repeat(jnp.repeat(x, 2, axis=3), 2, axis=4)
    out = jax.lax.conv_general_dilated(
        x_up, weight,
        window_strides=(1, 1, 1),
        padding=((0, 0), (1, 1), (1, 1)),
        dimension_numbers=("NCDHW", "OIDHW", "NCDHW"),
        precision=jax.lax.Precision.HIGHEST,
    )
    return out + bias[None, :, None, None, None]


if __name__ == "__main__":
    B, C_in, C_out, T, H, W = 2, 4, 4, 4, 8, 8

    key = jax.random.PRNGKey(0)
    kx, kw, kb = jax.random.split(key, 3)

    x = jax.random.normal(kx, (B, C_in, T, H, W), dtype=jnp.float32)

    # Deterministic param init matching PyTorch Conv3d default (kaiming-uniform bound).
    fan_in = C_in * 1 * 3 * 3
    bound = 1.0 / np.sqrt(fan_in)
    weight = jax.random.uniform(kw, (C_out, C_in, 1, 3, 3), jnp.float32, -bound, bound)
    bias = jax.random.uniform(kb, (C_out,), jnp.float32, -bound, bound)

    out = jax.jit(spatial_upsample2x)(x, weight, bias)
    out = jax.block_until_ready(out)

    assert out.shape == (B, C_out, T, 2 * H, 2 * W), out.shape

    ref = _reference(x, weight, bias)
    np.testing.assert_allclose(np.asarray(out), np.asarray(ref), rtol=1e-3, atol=1e-3)

    print("KERNEL_OK")
</pallas_src>

<mosaic_0001>
module attributes {stable_mosaic.version = 11 : i64} {
  func.func @_subpixel_conv_kernel(%arg0: i32, %arg1: memref<4x8x8x4xf32, #tpu.memory_space<vmem>>, %arg2: memref<36x16xf32, #tpu.memory_space<vmem>>, %arg3: memref<1x16xf32, #tpu.memory_space<vmem>>, %arg4: memref<4x8x8x16xf32, #tpu.memory_space<vmem>>, %arg5: memref<4x10x10x4xf32, #tpu.memory_space<vmem>>, %arg6: memref<4x8x8x36xf32, #tpu.memory_space<vmem>>) attributes {dimension_semantics = [#tpu.dimension_semantics<parallel>], iteration_bounds = array<i64: 2>, scalar_prefetch = 0 : i64, scratch_operands = 2 : i64, tpu.core_type = #tpu.core_type<tc>, window_params = [{transform_indices = @transform_0, window_bounds = array<i64: 4, 8, 8, 4>}, {pipeline_mode = #tpu.pipeline_mode<synchronous>, transform_indices = @transform_1, window_bounds = array<i64: 36, 16>}, {pipeline_mode = #tpu.pipeline_mode<synchronous>, transform_indices = @transform_2, window_bounds = array<i64: 1, 16>}, {transform_indices = @transform_3, window_bounds = array<i64: 4, 8, 8, 16>}]} {
    %cst = arith.constant 0.000000e+00 : f32
    %0 = vector.broadcast %cst : f32 to vector<4x10x10x4xf32>
    %c0 = arith.constant 0 : index
    %c0_0 = arith.constant 0 : index
    %c0_1 = arith.constant 0 : index
    %c0_2 = arith.constant 0 : index
    %1 = vector.load %arg5[%c0, %c0_0, %c0_1, %c0_2] : memref<4x10x10x4xf32, #tpu.memory_space<vmem>>, vector<4x10x10x4xf32>
    tpu.vector_store %arg5[%c0, %c0_0, %c0_1, %c0_2], %0 {strides = array<i32>} : memref<4x10x10x4xf32, #tpu.memory_space<vmem>>, vector<4x10x10x4xf32>,
    %c0_3 = arith.constant 0 : index
    %c0_4 = arith.constant 0 : index
    %c0_5 = arith.constant 0 : index
    %c0_6 = arith.constant 0 : index
    %2 = vector.load %arg1[%c0_3, %c0_4, %c0_5, %c0_6] : memref<4x8x8x4xf32, #tpu.memory_space<vmem>>, vector<4x8x8x4xf32>
    %c0_7 = arith.constant 0 : index
    %c1 = arith.constant 1 : index
    %c1_8 = arith.constant 1 : index
    %c0_9 = arith.constant 0 : index
    %3 = vector.load %arg5[%c0_7, %c1, %c1_8, %c0_9] : memref<4x10x10x4xf32, #tpu.memory_space<vmem>>, vector<4x8x8x4xf32>
    tpu.vector_store %arg5[%c0_7, %c1, %c1_8, %c0_9], %2 {strides = array<i32>} : memref<4x10x10x4xf32, #tpu.memory_space<vmem>>, vector<4x8x8x4xf32>,
    %c0_10 = arith.constant 0 : index
    %c0_11 = arith.constant 0 : index
    %c0_12 = arith.constant 0 : index
    %c0_13 = arith.constant 0 : index
    %4 = vector.load %arg5[%c0_10, %c0_11, %c0_12, %c0_13] : memref<4x10x10x4xf32, #tpu.memory_space<vmem>>, vector<4x8x8x4xf32>
    %c0_14 = arith.constant 0 : index
    %c0_15 = arith.constant 0 : index
    %c0_16 = arith.constant 0 : index
    %c0_17 = arith.constant 0 : index
    %5 = vector.load %arg6[%c0_14, %c0_15, %c0_16, %c0_17] : memref<4x8x8x36xf32, #tpu.memory_space<vmem>>, vector<4x8x8x4xf32>
    tpu.vector_store %arg6[%c0_14, %c0_15, %c0_16, %c0_17], %4 {strides = array<i32>} : memref<4x8x8x36xf32, #tpu.memory_space<vmem>>, vector<4x8x8x4xf32>,
    %c0_18 = arith.constant 0 : index
    %c0_19 = arith.constant 0 : index
    %c1_20 = arith.constant 1 : index
    %c0_21 = arith.constant 0 : index
    %6 = vector.load %arg5[%c0_18, %c0_19, %c1_20, %c0_21] : memref<4x10x10x4xf32, #tpu.memory_space<vmem>>, vector<4x8x8x4xf32>
    %c0_22 = arith.constant 0 : index
    %c0_23 = arith.constant 0 : index
    %c0_24 = arith.constant 0 : index
    %c4 = arith.constant 4 : index
    %7 = vector.load %arg6[%c0_22, %c0_23, %c0_24, %c4] : memref<4x8x8x36xf32, #tpu.memory_space<vmem>>, vector<4x8x8x4xf32>
    tpu.vector_store %arg6[%c0_22, %c0_23, %c0_24, %c4], %6 {strides = array<i32>} : memref<4x8x8x36xf32, #tpu.memory_space<vmem>>, vector<4x8x8x4xf32>,
    %c0_25 = arith.constant 0 : index
    %c0_26 = arith.constant 0 : index
    %c2 = arith.constant 2 : index
    %c0_27 = arith.constant 0 : index
    %8 = vector.load %arg5[%c0_25, %c0_26, %c2, %c0_27] : memref<4x10x10x4xf32, #tpu.memory_space<vmem>>, vector<4x8x8x4xf32>
    %c0_28 = arith.constant 0 : index
    %c0_29 = arith.constant 0 : index
    %c0_30 = arith.constant 0 : index
    %c8 = arith.constant 8 : index
    %9 = vector.load %arg6[%c0_28, %c0_29, %c0_30, %c8] : memref<4x8x8x36xf32, #tpu.memory_space<vmem>>, vector<4x8x8x4xf32>
    tpu.vector_store %arg6[%c0_28, %c0_29, %c0_30, %c8], %8 {strides = array<i32>} : memref<4x8x8x36xf32, #tpu.memory_space<vmem>>, vector<4x8x8x4xf32>,
    %c0_31 = arith.constant 0 : index
    %c1_32 = arith.constant 1 : index
    %c0_33 = arith.constant 0 : index
    %c0_34 = arith.constant 0 : index
    %10 = vector.load %arg5[%c0_31, %c1_32, %c0_33, %c0_34] : memref<4x10x10x4xf32, #tpu.memory_space<vmem>>, vector<4x8x8x4xf32>
    %c0_35 = arith.constant 0 : index
    %c0_36 = arith.constant 0 : index
    %c0_37 = arith.constant 0 : index
    %c12 = arith.constant 12 : index
    %11 = vector.load %arg6[%c0_35, %c0_36, %c0_37, %c12] : memref<4x8x8x36xf32, #tpu.memory_space<vmem>>, vector<4x8x8x4xf32>
    tpu.vector_store %arg6[%c0_35, %c0_36, %c0_37, %c12], %10 {strides = array<i32>} : memref<4x8x8x36xf32, #tpu.memory_space<vmem>>, vector<4x8x8x4xf32>,
    %c0_38 = arith.constant 0 : index
    %c1_39 = arith.constant 1 : index
    %c1_40 = arith.constant 1 : index
    %c0_41 = arith.constant 0 : index
    %12 = vector.load %arg5[%c0_38, %c1_39, %c1_40, %c0_41] : memref<4x10x10x4xf32, #tpu.memory_space<vmem>>, vector<4x8x8x4xf32>
    %c0_42 = arith.constant 0 : index
    %c0_43 = arith.constant 0 : index
    %c0_44 = arith.constant 0 : index
    %c16 = arith.constant 16 : index
    %13 = vector.load %arg6[%c0_42, %c0_43, %c0_44, %c16] : memref<4x8x8x36xf32, #tpu.memory_space<vmem>>, vector<4x8x8x4xf32>
    tpu.vector_store %arg6[%c0_42, %c0_43, %c0_44, %c16], %12 {strides = array<i32>} : memref<4x8x8x36xf32, #tpu.memory_space<vmem>>, vector<4x8x8x4xf32>,
    %c0_45 = arith.constant 0 : index
    %c1_46 = arith.constant 1 : index
    %c2_47 = arith.constant 2 : index
    %c0_48 = arith.constant 0 : index
    %14 = vector.load %arg5[%c0_45, %c1_46, %c2_47, %c0_48] : memref<4x10x10x4xf32, #tpu.memory_space<vmem>>, vector<4x8x8x4xf32>
    %c0_49 = arith.constant 0 : index
    %c0_50 = arith.constant 0 : index
    %c0_51 = arith.constant 0 : index
    %c20 = arith.constant 20 : index
    %15 = vector.load %arg6[%c0_49, %c0_50, %c0_51, %c20] : memref<4x8x8x36xf32, #tpu.memory_space<vmem>>, vector<4x8x8x4xf32>
    tpu.vector_store %arg6[%c0_49, %c0_50, %c0_51, %c20], %14 {strides = array<i32>} : memref<4x8x8x36xf32, #tpu.memory_space<vmem>>, vector<4x8x8x4xf32>,
    %c0_52 = arith.constant 0 : index
    %c2_53 = arith.constant 2 : index
    %c0_54 = arith.constant 0 : index
    %c0_55 = arith.constant 0 : index
    %16 = vector.load %arg5[%c0_52, %c2_53, %c0_54, %c0_55] : memref<4x10x10x4xf32, #tpu.memory_space<vmem>>, vector<4x8x8x4xf32>
    %c0_56 = arith.constant 0 : index
    %c0_57 = arith.constant 0 : index
    %c0_58 = arith.constant 0 : index
    %c24 = arith.constant 24 : index
    %17 = vector.load %arg6[%c0_56, %c0_57, %c0_58, %c24] : memref<4x8x8x36xf32, #tpu.memory_space<vmem>>, vector<4x8x8x4xf32>
    tpu.vector_store %arg6[%c0_56, %c0_57, %c0_58, %c24], %16 {strides = array<i32>} : memref<4x8x8x36xf32, #tpu.memory_space<vmem>>, vector<4x8x8x4xf32>,
    %c0_59 = arith.constant 0 : index
    %c2_60 = arith.constant 2 : index
    %c1_61 = arith.constant 1 : index
    %c0_62 = arith.constant 0 : index
    %18 = vector.load %arg5[%c0_59, %c2_60, %c1_61, %c0_62] : memref<4x10x10x4xf32, #tpu.memory_space<vmem>>, vector<4x8x8x4xf32>
    %c0_63 = arith.constant 0 : index
    %c0_64 = arith.constant 0 : index
    %c0_65 = arith.constant 0 : index
    %c28 = arith.constant 28 : index
    %19 = vector.load %arg6[%c0_63, %c0_64, %c0_65, %c28] : memref<4x8x8x36xf32, #tpu.memory_space<vmem>>, vector<4x8x8x4xf32>
    tpu.vector_store %arg6[%c0_63, %c0_64, %c0_65, %c28], %18 {strides = array<i32>} : memref<4x8x8x36xf32, #tpu.memory_space<vmem>>, vector<4x8x8x4xf32>,
    %c0_66 = arith.constant 0 : index
    %c2_67 = arith.constant 2 : index
    %c2_68 = arith.constant 2 : index
    %c0_69 = arith.constant 0 : index
    %20 = vector.load %arg5[%c0_66, %c2_67, %c2_68, %c0_69] : memref<4x10x10x4xf32, #tpu.memory_space<vmem>>, vector<4x8x8x4xf32>
    %c0_70 = arith.constant 0 : index
    %c0_71 = arith.constant 0 : index
    %c0_72 = arith.constant 0 : index
    %c32 = arith.constant 32 : index
    %21 = vector.load %arg6[%c0_70, %c0_71, %c0_72, %c32] : memref<4x8x8x36xf32, #tpu.memory_space<vmem>>, vector<4x8x8x4xf32>
    tpu.vector_store %arg6[%c0_70, %c0_71, %c0_72, %c32], %20 {strides = array<i32>} : memref<4x8x8x36xf32, #tpu.memory_space<vmem>>, vector<4x8x8x4xf32>,
    %c0_73 = arith.constant 0 : index
    %c0_74 = arith.constant 0 : index
    %c0_75 = arith.constant 0 : index
    %c0_76 = arith.constant 0 : index
    %22 = vector.load %arg6[%c0_73, %c0_74, %c0_75, %c0_76] : memref<4x8x8x36xf32, #tpu.memory_space<vmem>>, vector<4x8x8x36xf32>
    %23 = vector.shape_cast %22 : vector<4x8x8x36xf32> to vector<256x36xf32>
    %c0_77 = arith.constant 0 : index
    %c0_78 = arith.constant 0 : index
    %24 = vector.load %arg2[%c0_77, %c0_78] : memref<36x16xf32, #tpu.memory_space<vmem>>, vector<36x16xf32>
    %cst_79 = arith.constant dense<0.000000e+00> : vector<256x16xf32>
    %25 = tpu.matmul %23, %24, %cst_79 {dimension_numbers = #tpu.dot_dimension_numbers<[1], [0], [0], [1], [0, 0, 1, 1], [], []>} : vector<256x36xf32>, vector<36x16xf32>, vector<256x16xf32> -> vector<256x16xf32>
    %c0_80 = arith.constant 0 : index
    %c0_81 = arith.constant 0 : index
    %26 = vector.load %arg3[%c0_80, %c0_81] : memref<1x16xf32, #tpu.memory_space<vmem>>, vector<1x16xf32>
    %27 = vector.broadcast %26 : vector<1x16xf32> to vector<256x16xf32>
    %28 = arith.addf %25, %27 : vector<256x16xf32>
    %29 = vector.shape_cast %28 : vector<256x16xf32> to vector<4x8x8x16xf32>
    %c0_82 = arith.constant 0 : index
    %c0_83 = arith.constant 0 : index
    %c0_84 = arith.constant 0 : index
    %c0_85 = arith.constant 0 : index
    %30 = vector.load %arg4[%c0_82, %c0_83, %c0_84, %c0_85] : memref<4x8x8x16xf32, #tpu.memory_space<vmem>>, vector<4x8x8x16xf32>
    tpu.vector_store %arg4[%c0_82, %c0_83, %c0_84, %c0_85], %29 {strides = array<i32>} : memref<4x8x8x16xf32, #tpu.memory_space<vmem>>, vector<4x8x8x16xf32>,
    return
  }
  func.func @transform_0(%arg0: i32) -> (i32, i32, i32, i32) {
    %c0_i32 = arith.constant 0 : i32
    %c0_i32_0 = arith.constant 0 : i32
    %c0_i32_1 = arith.constant 0 : i32
    %c0_i32_2 = arith.constant 0 : i32
    return %arg0, %c0_i32, %c0_i32_0, %c0_i32_1 : i32, i32, i32, i32
  }
  func.func @transform_1(%arg0: i32) -> (i32, i32) {
    %c0_i32 = arith.constant 0 : i32
    %c0_i32_0 = arith.constant 0 : i32
    %c0_i32_1 = arith.constant 0 : i32
    return %c0_i32, %c0_i32_0 : i32, i32
  }
  func.func @transform_2(%arg0: i32) -> (i32, i32) {
    %c0_i32 = arith.constant 0 : i32
    %c0_i32_0 = arith.constant 0 : i32
    %c0_i32_1 = arith.constant 0 : i32
    return %c0_i32, %c0_i32_0 : i32, i32
  }
  func.func @transform_3(%arg0: i32) -> (i32, i32, i32, i32) {
    %c0_i32 = arith.constant 0 : i32
    %c0_i32_0 = arith.constant 0 : i32
    %c0_i32_1 = arith.constant 0 : i32
    %c0_i32_2 = arith.constant 0 : i32
    return %arg0, %c0_i32, %c0_i32_0, %c0_i32_1 : i32, i32, i32, i32
  }
}

</mosaic_0001>

<llo_original>
// kernel: tile.8
$region0: #{tile.8}
  #allocation0 [shape = 's32[1]{0}', space=sflag, size = 0x4, scoped, tag = 'scoped memory for tile.8']
  %s0 = inlined_call_operand.vmem [shape: f32[4], index: 0, kind: input, shape index: {}]
  %s1 = inlined_call_operand.vmem [shape: f32[4,4], index: 1, kind: output, shape index: {}]
  // Predicated region
  $region2: #{tile.8} parent=0 // pred_check
    _
  $region3: #{tile.8} parent=0 // pred_check_branch
    %3 = sbr.rel (0) target = $region5
  $region4: #{tile.8} parent=0 // pred_region
    _
  $region5: #{tile.8} parent=0 // pred_fallthru
    _
  %v4 = vld [vmem:[%s0] ss:$0 sm:$0xff]
  %5 = vst [vmem:[%s1] sm:$0xf] %v4

// kernel: tile.9
$region0: #{tile.9}
  %s0 = inlined_call_operand.vmem [shape: f32[4,4], index: 0, kind: input, shape index: {}]
  %s1 = inlined_call_operand.vmem [shape: f32[1,16], index: 1, kind: output, shape index: {}]
  $region1: #{tile.9} parent=0
    #allocation0 [shape = 'u8[4096]{0}', space=vmem, size = 0x1000, scoped, tag = 'scoped mem for output reshape']
    #allocation1 [shape = 'u8[4096]{0}', space=vmem, size = 0x1000, scoped, tag = 'scoped mem for input reshape']
    %s3 = ssub.s32 16, 1
    %v4 = vld [vmem:[%s0] sm:%s3]
    %5 = vst [vmem:[#allocation1] sm:%s3] %v4
    %v6 = vld [vmem:[#allocation1] sm:$0x1]
    %vm7 = vcmask 31744
    %8 = vst.msk [vmem:[#allocation0] sm:$0x1] %vm7, %v6
    %s9 = scalar_lea.vmem [#allocation1], 3
    %v10 = vld [vmem:[%s9] sm:$0x1]
    %11 = vrot.lane.b32.xlu0 %v10, 12
    %v12 = vpop.permute.xlu0 %11
    %vm13 = vcmask 130144
    %14 = vst.msk [vmem:[#allocation0] sm:$0x1] %vm13, %v12
    %s15 = scalar_lea.vmem [#allocation1], 2
    %v16 = vld [vmem:[%s15] sm:$0x1]
    %17 = vrot.lane.b32.xlu0 %v16, 8
    %v18 = vpop.permute.xlu0 %17
    %vm19 = vcmask 97344
    %20 = vst.msk [vmem:[#allocation0] sm:$0x1] %vm19, %v18
    %s21 = scalar_lea.vmem [#allocation1], 1
    %v22 = vld [vmem:[%s21] sm:$0x1]
    %23 = vrot.lane.b32.xlu0 %v22, 4
    %v24 = vpop.permute.xlu0 %23
    %vm25 = vcmask 64544
    %26 = vst.msk [vmem:[#allocation0] sm:$0x1] %vm25, %v24
    %s28 = ssub.s32 2, 1
    %v29 = vld [vmem:[#allocation0] sm:%s28]
    %s31 = ssub.s32 2, 1
    %32 = vst [vmem:[%s1] sm:%s31] %v29

// kernel: spatial_upsample2x.1
$region0: #{spatial_upsample2x.1}
  #allocation0 [shape = 'u32[]', space=smem, size = 0x4, offset = 0x4, fixed_abs, tag = 'smem constant byte address 0x4 - core index']
  #allocation1 [shape = 'u32[72,128]{1,0:T(1,128)}', space=vmem, size = 0x9000, scoped, tag = 'internal scratch']
  #allocation2 [shape = 'f32[4,10,10,4]{3,2,1,0:T(8,128)}', space=vmem, size = 0x50000, scoped, tag = 'scratch operand']
  #allocation3 [shape = 'f32[4,8,8,36]{3,2,1,0:T(8,128)}', space=vmem, size = 0x20000, scoped, tag = 'scratch operand']
  %s0 = inlined_call_operand.vmem [shape: f32[8,8,8,4], index: 0, kind: input, shape index: {}]
  %s1 = inlined_call_operand.vmem [shape: f32[36,16], index: 1, kind: input, shape index: {}]
  %s2 = inlined_call_operand.vmem [shape: f32[1,16], index: 2, kind: input, shape index: {}]
  %s3 = inlined_call_operand.vmem [shape: f32[8,8,8,16], index: 3, kind: output, shape index: {}]
  %s4 = sld [smem:[#allocation0]]
  $region45: #{spatial_upsample2x.1} parent=0
    _
  %s6 = ssub.s32 1, %s4
  %s7 = scalar_select 0, %s6, %s4
  loop: start=0, step=1, limit=4
  $region2: #{spatial_upsample2x.1} parent=0 // loop_pre_header
    _
  $region3: #{spatial_upsample2x.1} parent=0 // loop_header
    %s9 = sphi 0, %s13
    %p10 = scmp.ge.s32.totalorder %s9, 4
    %s19 = sphi 0, %s21
    %s22 = sphi 0, %s19
    %s23 = sphi 0, %s22
    %s39 = sphi 0, %s23
    %s43 = sphi 0, %s43
    %s45 = sphi 0, %s43
    %s46 = sphi 0, %s45
    %s60 = sphi 0, %s46
    %s64 = sphi 0, %s64
    %s66 = sphi 0, %s64
    %s67 = sphi 0, %s66
    %s81 = sphi 0, %s67
    %s87 = sphi 0, %s89
    %s90 = sphi 0, %s87
    %s91 = sphi 0, %s90
    %s107 = sphi 0, %s91
  $region4: #{spatial_upsample2x.1} parent=0 // loop_header_branch
    %12 = sbr.rel (%p10) target = $region8
  $region5: #{spatial_upsample2x.1} parent=0 // loop_body
    %s14 = ssub.s32 %s9, 1
    %s15 = ssub.s32 %s9, 2
    %s16 = sadd.s32 %s9, 1
    %s17 = ssub.s32 %s9, %s16
    %p18 = scmp.eq.s32.totalorder %s17, 0
    %s20 = sadd.s32 %s19, 1
    %s21 = scalar_select %p18, %s19, %s20
    %p24 = pneg %p18
    %p25 = scmp.eq.s32.totalorder %s9, 1
    %p26 = por %p24, %p25
    %p27 = scmp.ne.s32.totalorder %s19, %s22
    %p28 = scmp.eq.s32.totalorder %s9, 0
    %p29 = por %p27, %p28
    %p30 = scmp.ne.s32.totalorder %s19, %s22
    %p31 = scmp.eq.s32.totalorder %s14, 1
    %p32 = por %p30, %p31
    %p33 = scmp.ne.s32.totalorder %s22, %s23
    %p34 = scmp.eq.s32.totalorder %s14, 0
    %p35 = por %p33, %p34
    %p36 = scmp.ne.s32.totalorder %s22, %s23
    %p37 = scmp.eq.s32.totalorder %s15, 1
    %p38 = por %p36, %p37
    %p40 = scmp.ne.s32.totalorder %s23, %s39
    %p41 = scmp.eq.s32.totalorder %s15, 0
    %p42 = por %p40, %p41
    %s44 = sadd.s32 %s43, 1
    %p47 = scmp.eq.s32.totalorder %s9, 1
    %p48 = scmp.ne.s32.totalorder %s43, %s45
    %p49 = scmp.eq.s32.totalorder %s9, 0
    %p50 = por %p48, %p49
    %p51 = scmp.ne.s32.totalorder %s43, %s45
    %p52 = scmp.eq.s32.totalorder %s14, 1
    %p53 = por %p51, %p52
    %p54 = scmp.ne.s32.totalorder %s45, %s46
    %p55 = scmp.eq.s32.totalorder %s14, 0
    %p56 = por %p54, %p55
    %p57 = scmp.ne.s32.totalorder %s45, %s46
    %p58 = scmp.eq.s32.totalorder %s15, 1
    %p59 = por %p57, %p58
    %p61 = scmp.ne.s32.totalorder %s46, %s60
    %p62 = scmp.eq.s32.totalorder %s15, 0
    %p63 = por %p61, %p62
    %s65 = sadd.s32 %s64, 1
    %p68 = scmp.eq.s32.totalorder %s9, 1
    %p69 = scmp.ne.s32.totalorder %s64, %s66
    %p70 = scmp.eq.s32.totalorder %s9, 0
    %p71 = por %p69, %p70
    %p72 = scmp.ne.s32.totalorder %s64, %s66
    %p73 = scmp.eq.s32.totalorder %s14, 1
    %p74 = por %p72, %p73
    %p75 = scmp.ne.s32.totalorder %s66, %s67
    %p76 = scmp.eq.s32.totalorder %s14, 0
    %p77 = por %p75, %p76
    %p78 = scmp.ne.s32.totalorder %s66, %s67
    %p79 = scmp.eq.s32.totalorder %s15, 1
    %p80 = por %p78, %p79
    %p82 = scmp.ne.s32.totalorder %s67, %s81
    %p83 = scmp.eq.s32.totalorder %s15, 0
    %p84 = por %p82, %p83
    %s85 = ssub.s32 %s9, %s16
    %p86 = scmp.eq.s32.totalorder %s85, 0
    %s88 = sadd.s32 %s87, 1
    %s89 = scalar_select %p86, %s87, %s88
    %p92 = pneg %p86
    %p93 = scmp.eq.s32.totalorder %s9, 1
    %p94 = por %p92, %p93
    %p95 = scmp.ne.s32.totalorder %s87, %s90
    %p96 = scmp.eq.s32.totalorder %s9, 0
    %p97 = por %p95, %p96
    %p98 = scmp.ne.s32.totalorder %s87, %s90
    %p99 = scmp.eq.s32.totalorder %s14, 1
    %p100 = por %p98, %p99
    %p101 = scmp.ne.s32.totalorder %s90, %s91
    %p102 = scmp.eq.s32.totalorder %s14, 0
    %p103 = por %p101, %p102
    %p104 = scmp.ne.s32.totalorder %s90, %s91
    %p105 = scmp.eq.s32.totalorder %s15, 1
    %p106 = por %p104, %p105
    %p108 = scmp.ne.s32.totalorder %s91, %s107
    %p109 = scmp.eq.s32.totalorder %s15, 0
    %p110 = por %p108, %p109
    %p111 = scmp.le.s32.totalorder 1, %s9
    %p112 = scmp.lt.s32.totalorder %s9, 3
    %p113 = pnand %p111, %p112
    %p114 = pneg %p113
    // Predicated region
    $region9: #{spatial_upsample2x.1} parent=5 // pred_check
      _
    $region10: #{spatial_upsample2x.1} parent=5 // pred_check_branch
      %116 = sbr.rel (%p113) target = $region12
    $region11: #{spatial_upsample2x.1} parent=5 // pred_region
      %s117 = ssub.s32 %s9, 1
      // Predicated region
      $region13: #{spatial_upsample2x.1} parent=11 // pred_check
        %p118 = pneg %p56
      $region14: #{spatial_upsample2x.1} parent=11 // pred_check_branch
        %120 = sbr.rel (%p118) target = $region16
      $region15: #{spatial_upsample2x.1} parent=11 // pred_region
        _
      $region16: #{spatial_upsample2x.1} parent=11 // pred_fallthru
        _
      // Predicated region
      $region17: #{spatial_upsample2x.1} parent=11 // pred_check
        %p121 = pneg %p77
      $region18: #{spatial_upsample2x.1} parent=11 // pred_check_branch
        %123 = sbr.rel (%p121) target = $region20
      $region19: #{spatial_upsample2x.1} parent=11 // pred_region
        _
      $region20: #{spatial_upsample2x.1} parent=11 // pred_fallthru
        _
    $region12: #{spatial_upsample2x.1} parent=5 // pred_fallthru
      _
    %p124 = scmp.lt.s32.totalorder %s9, 2
    // Predicated region
    $region21: #{spatial_upsample2x.1} parent=5 // pred_check
      %p125 = pneg %p124
    $region22: #{spatial_upsample2x.1} parent=5 // pred_check_branch
      %127 = sbr.rel (%p125) target = $region24
    $region23: #{spatial_upsample2x.1} parent=5 // pred_region
      // Predicated region
      $region25: #{spatial_upsample2x.1} parent=23 // pred_check
        %p128 = pneg %p29
      $region26: #{spatial_upsample2x.1} parent=23 // pred_check_branch
        %130 = sbr.rel (%p128) target = $region28
      $region27: #{spatial_upsample2x.1} parent=23 // pred_region
        %s131 = smul.u32 4, %s9
        %p132 = scmp.lt.s32.totalorder %s131, 7
        %s133 = scalar_select %p132, %s131, 7
        %s134 = smul.addr %s133, 8
        %s135 = smul.addr %s134, 8
        %s136 = scalar_lea.vmem %s0, %s135
        %s137 = smul.u32 4, %s9
      $region28: #{spatial_upsample2x.1} parent=23 // pred_fallthru
        _
    $region24: #{spatial_upsample2x.1} parent=5 // pred_fallthru
      _
    %p138 = scmp.le.s32.totalorder 1, %s9
    %p139 = scmp.lt.s32.totalorder %s9, 3
    %p140 = pnand %p138, %p139
    %p141 = pneg %p140
    // Predicated region
    $region29: #{spatial_upsample2x.1} parent=5 // pred_check
      _
    $region30: #{spatial_upsample2x.1} parent=5 // pred_check_branch
      %143 = sbr.rel (%p140) target = $region32
    $region31: #{spatial_upsample2x.1} parent=5 // pred_region
      %s144 = ssub.s32 %s9, 1
      %s145 = smul.u32 4, %s14
      %p146 = scmp.lt.s32.totalorder %s145, 7
      %s147 = scalar_select %p146, %s145, 7
      %s148 = smul.addr %s147, 8
      %s149 = smul.addr %s148, 8
      %s150 = scalar_lea.vmem %s0, %s149
      %p151 = pneg %p35
      %p152 = pneg %p32
      %p153 = pneg %p56
      %p154 = pneg %p53
      %p155 = pneg %p77
      %p156 = pneg %p74
      %p157 = pneg %p103
      %p158 = pneg %p100
      %s159 = smul.u32 4, %s14
      %p160 = scmp.lt.s32.totalorder %s159, 7
      %s161 = scalar_select %p160, %s159, 7
      %s162 = smul.addr %s161, 8
      %s163 = smul.addr %s162, 8
      %s164 = scalar_lea.vmem %s3, %s163
      %s165 = smul.u32 4, %s14
      %p166 = scmp.lt.s32.totalorder %s165, 7
      %s167 = scalar_select %p166, %s165, 7
      %s168 = smul.addr %s167, 8
      %s169 = smul.addr %s168, 8
      %s170 = scalar_lea.vmem %s0, %s169
      %s171 = smul.u32 4, %s14
      %s172 = smul.u32 4, %s14
      %p173 = scmp.lt.s32.totalorder %s172, 7
      %s174 = scalar_select %p173, %s172, 7
      %s175 = smul.addr %s174, 8
      %s176 = smul.addr %s175, 8
      %s177 = scalar_lea.vmem %s3, %s176
      %s178 = smul.u32 4, %s14
      %vm179 = vcmask 31744
      %180 = vst.msk [vmem:[#allocation2] sm:$0xff] %vm179, 0.0
      %vm181 = vcmask 25600
      %182 = vst.msk [vmem:[#allocation2 + $0x8] sm:$0x3] %vm181, 0.0
      %183 = vst.msk [vmem:[#allocation2 + $0x10] sm:$0xff] %vm179, 0.0
      %184 = vst.msk [vmem:[#allocation2 + $0x18] sm:$0x3] %vm181, 0.0
      %185 = vst.msk [vmem:[#allocation2 + $0x20] sm:$0xff] %vm179, 0.0
      %186 = vst.msk [vmem:[#allocation2 + $0x28] sm:$0x3] %vm181, 0.0
      %187 = vst.msk [vmem:[#allocation2 + $0x30] sm:$0xff] %vm179, 0.0
      %188 = vst.msk [vmem:[#allocation2 + $0x38] sm:$0x3] %vm181, 0.0
      %189 = vst.msk [vmem:[#allocation2 + $0x40] sm:$0xff] %vm179, 0.0
      %190 = vst.msk [vmem:[#allocation2 + $0x48] sm:$0x3] %vm181, 0.0
      %191 = vst.msk [vmem:[#allocation2 + $0x50] sm:$0xff] %vm179, 0.0
      %192 = vst.msk [vmem:[#allocation2 + $0x58] sm:$0x3] %vm181, 0.0
      %193 = vst.msk [vmem:[#allocation2 + $0x60] sm:$0xff] %vm179, 0.0
      %194 = vst.msk [vmem:[#allocation2 + $0x68] sm:$0x3] %vm181, 0.0
      %195 = vst.msk [vmem:[#allocation2 + $0x70] sm:$0xff] %vm179, 0.0
      %196 = vst.msk [vmem:[#allocation2 + $0x78] sm:$0x3] %vm181, 0.0
      %197 = vst.msk [vmem:[#allocation2 + $0x80] sm:$0xff] %vm179, 0.0
      %198 = vst.msk [vmem:[#allocation2 + $0x88] sm:$0x3] %vm181, 0.0
      %199 = vst.msk [vmem:[#allocation2 + $0x90] sm:$0xff] %vm179, 0.0
      %200 = vst.msk [vmem:[#allocation2 + $0x98] sm:$0x3] %vm181, 0.0
      %201 = vst.msk [vmem:[#allocation2 + $0xa0] sm:$0xff] %vm179, 0.0
      %202 = vst.msk [vmem:[#allocation2 + $0xa8] sm:$0x3] %vm181, 0.0
      %203 = vst.msk [vmem:[#allocation2 + $0xb0] sm:$0xff] %vm179, 0.0
      %204 = vst.msk [vmem:[#allocation2 + $0xb8] sm:$0x3] %vm181, 0.0
      %205 = vst.msk [vmem:[#allocation2 + $0xc0] sm:$0xff] %vm179, 0.0
      %206 = vst.msk [vmem:[#allocation2 + $0xc8] sm:$0x3] %vm181, 0.0
      %207 = vst.msk [vmem:[#allocation2 + $0xd0] sm:$0xff] %vm179, 0.0
      %208 = vst.msk [vmem:[#allocation2 + $0xd8] sm:$0x3] %vm181, 0.0
      %209 = vst.msk [vmem:[#allocation2 + $0xe0] sm:$0xff] %vm179, 0.0
      %210 = vst.msk [vmem:[#allocation2 + $0xe8] sm:$0x3] %vm181, 0.0
      %211 = vst.msk [vmem:[#allocation2 + $0xf0] sm:$0xff] %vm179, 0.0
      %212 = vst.msk [vmem:[#allocation2 + $0xf8] sm:$0x3] %vm181, 0.0
      %213 = vst.msk [vmem:[#allocation2 + $0x100] sm:$0xff] %vm179, 0.0
      %214 = vst.msk [vmem:[#allocation2 + $0x108] sm:$0x3] %vm181, 0.0
      %215 = vst.msk [vmem:[#allocation2 + $0x110] sm:$0xff] %vm179, 0.0
      %216 = vst.msk [vmem:[#allocation2 + $0x118] sm:$0x3] %vm181, 0.0
      %217 = vst.msk [vmem:[#allocation2 + $0x120] sm:$0xff] %vm179, 0.0
      %218 = vst.msk [vmem:[#allocation2 + $0x128] sm:$0x3] %vm181, 0.0
      %219 = vst.msk [vmem:[#allocation2 + $0x130] sm:$0xff] %vm179, 0.0
      %220 = vst.msk [vmem:[#allocation2 + $0x138] sm:$0x3] %vm181, 0.0
      %221 = vst.msk [vmem:[#allocation2 + $0x140] sm:$0xff] %vm179, 0.0
      %222 = vst.msk [vmem:[#allocation2 + $0x148] sm:$0x3] %vm181, 0.0
      %223 = vst.msk [vmem:[#allocation2 + $0x150] sm:$0xff] %vm179, 0.0
      %224 = vst.msk [vmem:[#allocation2 + $0x158] sm:$0x3] %vm181, 0.0
      %225 = vst.msk [vmem:[#allocation2 + $0x160] sm:$0xff] %vm179, 0.0
      %226 = vst.msk [vmem:[#allocation2 + $0x168] sm:$0x3] %vm181, 0.0
      %227 = vst.msk [vmem:[#allocation2 + $0x170] sm:$0xff] %vm179, 0.0
      %228 = vst.msk [vmem:[#allocation2 + $0x178] sm:$0x3] %vm181, 0.0
      %229 = vst.msk [vmem:[#allocation2 + $0x180] sm:$0xff] %vm179, 0.0
      %230 = vst.msk [vmem:[#allocation2 + $0x188] sm:$0x3] %vm181, 0.0
      %231 = vst.msk [vmem:[#allocation2 + $0x190] sm:$0xff] %vm179, 0.0
      %232 = vst.msk [vmem:[#allocation2 + $0x198] sm:$0x3] %vm181, 0.0
      %233 = vst.msk [vmem:[#allocation2 + $0x1a0] sm:$0xff] %vm179, 0.0
      %234 = vst.msk [vmem:[#allocation2 + $0x1a8] sm:$0x3] %vm181, 0.0
      %235 = vst.msk [vmem:[#allocation2 + $0x1b0] sm:$0xff] %vm179, 0.0
      %236 = vst.msk [vmem:[#allocation2 + $0x1b8] sm:$0x3] %vm181, 0.0
      %237 = vst.msk [vmem:[#allocation2 + $0x1c0] sm:$0xff] %vm179, 0.0
      %238 = vst.msk [vmem:[#allocation2 + $0x1c8] sm:$0x3] %vm181, 0.0
      %239 = vst.msk [vmem:[#allocation2 + $0x1d0] sm:$0xff] %vm179, 0.0
      %240 = vst.msk [vmem:[#allocation2 + $0x1d8] sm:$0x3] %vm181, 0.0
      %241 = vst.msk [vmem:[#allocation2 + $0x1e0] sm:$0xff] %vm179, 0.0
      %242 = vst.msk [vmem:[#allocation2 + $0x1e8] sm:$0x3] %vm181, 0.0
      %243 = vst.msk [vmem:[#allocation2 + $0x1f0] sm:$0xff] %vm179, 0.0
      %244 = vst.msk [vmem:[#allocation2 + $0x1f8] sm:$0x3] %vm181, 0.0
      %245 = vst.msk [vmem:[#allocation2 + $0x200] sm:$0xff] %vm179, 0.0
      %246 = vst.msk [vmem:[#allocation2 + $0x208] sm:$0x3] %vm181, 0.0
      %247 = vst.msk [vmem:[#allocation2 + $0x210] sm:$0xff] %vm179, 0.0
      %248 = vst.msk [vmem:[#allocation2 + $0x218] sm:$0x3] %vm181, 0.0
      %249 = vst.msk [vmem:[#allocation2 + $0x220] sm:$0xff] %vm179, 0.0
      %250 = vst.msk [vmem:[#allocation2 + $0x228] sm:$0x3] %vm181, 0.0
      %251 = vst.msk [vmem:[#allocation2 + $0x230] sm:$0xff] %vm179, 0.0
      %252 = vst.msk [vmem:[#allocation2 + $0x238] sm:$0x3] %vm181, 0.0
      %253 = vst.msk [vmem:[#allocation2 + $0x240] sm:$0xff] %vm179, 0.0
      %254 = vst.msk [vmem:[#allocation2 + $0x248] sm:$0x3] %vm181, 0.0
      %255 = vst.msk [vmem:[#allocation2 + $0x250] sm:$0xff] %vm179, 0.0
      %256 = vst.msk [vmem:[#allocation2 + $0x258] sm:$0x3] %vm181, 0.0
      %257 = vst.msk [vmem:[#allocation2 + $0x260] sm:$0xff] %vm179, 0.0
      %258 = vst.msk [vmem:[#allocation2 + $0x268] sm:$0x3] %vm181, 0.0
      %259 = vst.msk [vmem:[#allocation2 + $0x270] sm:$0xff] %vm179, 0.0
      %260 = vst.msk [vmem:[#allocation2 + $0x278] sm:$0x3] %vm181, 0.0
      %v261 = vld [vmem:[%s170] sm:$0xff]
      %v262 = vld [vmem:[%s170 + $0x8] sm:$0xff]
      %v263 = vld [vmem:[%s170 + $0x10] sm:$0xff]
      %v264 = vld [vmem:[%s170 + $0x18] sm:$0xff]
      %v265 = vld [vmem:[%s170 + $0x20] sm:$0xff]
      %v266 = vld [vmem:[%s170 + $0x28] sm:$0xff]
      %v267 = vld [vmem:[%s170 + $0x30] sm:$0xff]
      %v268 = vld [vmem:[%s170 + $0x38] sm:$0xff]
      %v269 = vld [vmem:[%s170 + $0x40] sm:$0xff]
      %v270 = vld [vmem:[%s170 + $0x48] sm:$0xff]
      %v271 = vld [vmem:[%s170 + $0x50] sm:$0xff]
      %v272 = vld [vmem:[%s170 + $0x58] sm:$0xff]
      %v273 = vld [vmem:[%s170 + $0x60] sm:$0xff]
      %v274 = vld [vmem:[%s170 + $0x68] sm:$0xff]
      %v275 = vld [vmem:[%s170 + $0x70] sm:$0xff]
      %v276 = vld [vmem:[%s170 + $0x78] sm:$0xff]
      %v277 = vld [vmem:[%s170 + $0x80] sm:$0xff]
      %v278 = vld [vmem:[%s170 + $0x88] sm:$0xff]
      %v279 = vld [vmem:[%s170 + $0x90] sm:$0xff]
      %v280 = vld [vmem:[%s170 + $0x98] sm:$0xff]
      %v281 = vld [vmem:[%s170 + $0xa0] sm:$0xff]
      %v282 = vld [vmem:[%s170 + $0xa8] sm:$0xff]
      %v283 = vld [vmem:[%s170 + $0xb0] sm:$0xff]
      %v284 = vld [vmem:[%s170 + $0xb8] sm:$0xff]
      %v285 = vld [vmem:[%s170 + $0xc0] sm:$0xff]
      %v286 = vld [vmem:[%s170 + $0xc8] sm:$0xff]
      %v287 = vld [vmem:[%s170 + $0xd0] sm:$0xff]
      %v288 = vld [vmem:[%s170 + $0xd8] sm:$0xff]
      %v289 = vld [vmem:[%s170 + $0xe0] sm:$0xff]
      %v290 = vld [vmem:[%s170 + $0xe8] sm:$0xff]
      %v291 = vld [vmem:[%s170 + $0xf0] sm:$0xff]
      %v292 = vld [vmem:[%s170 + $0xf8] sm:$0xff]
      %s293 = scalar_lea.vmem [#allocation2], 16
      %294 = vst.msk [vmem:[%s293 + $0x1] sm:$0xff] %vm179, %v261
      %295 = vst.msk [vmem:[%s293 + $0x11] sm:$0xff] %vm179, %v262
      %296 = vst.msk [vmem:[%s293 + $0x21] sm:$0xff] %vm179, %v263
      %297 = vst.msk [vmem:[%s293 + $0x31] sm:$0xff] %vm179, %v264
      %298 = vst.msk [vmem:[%s293 + $0x41] sm:$0xff] %vm179, %v265
      %299 = vst.msk [vmem:[%s293 + $0x51] sm:$0xff] %vm179, %v266
      %300 = vst.msk [vmem:[%s293 + $0x61] sm:$0xff] %vm179, %v267
      %301 = vst.msk [vmem:[%s293 + $0x71] sm:$0xff] %vm179, %v268
      %302 = vst.msk [vmem:[%s293 + $0xa1] sm:$0xff] %vm179, %v269
      %303 = vst.msk [vmem:[%s293 + $0xb1] sm:$0xff] %vm179, %v270
      %304 = vst.msk [vmem:[%s293 + $0xc1] sm:$0xff] %vm179, %v271
      %305 = vst.msk [vmem:[%s293 + $0xd1] sm:$0xff] %vm179, %v272
      %306 = vst.msk [vmem:[%s293 + $0xe1] sm:$0xff] %vm179, %v273
      %307 = vst.msk [vmem:[%s293 + $0xf1] sm:$0xff] %vm179, %v274
      %308 = vst.msk [vmem:[%s293 + $0x101] sm:$0xff] %vm179, %v275
      %309 = vst.msk [vmem:[%s293 + $0x111] sm:$0xff] %vm179, %v276
      %310 = vst.msk [vmem:[%s293 + $0x141] sm:$0xff] %vm179, %v277
      %311 = vst.msk [vmem:[%s293 + $0x151] sm:$0xff] %vm179, %v278
      %312 = vst.msk [vmem:[%s293 + $0x161] sm:$0xff] %vm179, %v279
      %313 = vst.msk [vmem:[%s293 + $0x171] sm:$0xff] %vm179, %v280
      %314 = vst.msk [vmem:[%s293 + $0x181] sm:$0xff] %vm179, %v281
      %315 = vst.msk [vmem:[%s293 + $0x191] sm:$0xff] %vm179, %v282
      %316 = vst.msk [vmem:[%s293 + $0x1a1] sm:$0xff] %vm179, %v283
      %317 = vst.msk [vmem:[%s293 + $0x1b1] sm:$0xff] %vm179, %v284
      %318 = vst.msk [vmem:[%s293 + $0x1e1] sm:$0xff] %vm179, %v285
      %319 = vst.msk [vmem:[%s293 + $0x1f1] sm:$0xff] %vm179, %v286
      %320 = vst.msk [vmem:[%s293 + $0x201] sm:$0xff] %vm179, %v287
      %321 = vst.msk [vmem:[%s293 + $0x211] sm:$0xff] %vm179, %v288
      %322 = vst.msk [vmem:[%s293 + $0x221] sm:$0xff] %vm179, %v289
      %323 = vst.msk [vmem:[%s293 + $0x231] sm:$0xff] %vm179, %v290
      %324 = vst.msk [vmem:[%s293 + $0x241] sm:$0xff] %vm179, %v291
      %325 = vst.msk [vmem:[%s293 + $0x251] sm:$0xff] %vm179, %v292
      %v326 = vld [vmem:[#allocation2] sm:$0xff]
      %v327 = vld [vmem:[#allocation2 + $0x10] sm:$0xff]
      %v328 = vld [vmem:[#allocation2 + $0x20] sm:$0xff]
      %v329 = vld [vmem:[#allocation2 + $0x30] sm:$0xff]
      %v330 = vld [vmem:[#allocation2 + $0x40] sm:$0xff]
      %v331 = vld [vmem:[#allocation2 + $0x50] sm:$0xff]
      %v332 = vld [vmem:[#allocation2 + $0x60] sm:$0xff]
      %v333 = vld [vmem:[#allocation2 + $0x70] sm:$0xff]
      %v334 = vld [vmem:[#allocation2 + $0xa0] sm:$0xff]
      %v335 = vld [vmem:[#allocation2 + $0xb0] sm:$0xff]
      %v336 = vld [vmem:[#allocation2 + $0xc0] sm:$0xff]
      %v337 = vld [vmem:[#allocation2 + $0xd0] sm:$0xff]
      %v338 = vld [vmem:[#allocation2 + $0xe0] sm:$0xff]
      %v339 = vld [vmem:[#allocation2 + $0xf0] sm:$0xff]
      %v340 = vld [vmem:[#allocation2 + $0x100] sm:$0xff]
      %v341 = vld [vmem:[#allocation2 + $0x110] sm:$0xff]
      %v342 = vld [vmem:[#allocation2 + $0x140] sm:$0xff]
      %v343 = vld [vmem:[#allocation2 + $0x150] sm:$0xff]
      %v344 = vld [vmem:[#allocation2 + $0x160] sm:$0xff]
      %v345 = vld [vmem:[#allocation2 + $0x170] sm:$0xff]
      %v346 = vld [vmem:[#allocation2 + $0x180] sm:$0xff]
      %v347 = vld [vmem:[#allocation2 + $0x190] sm:$0xff]
      %v348 = vld [vmem:[#allocation2 + $0x1a0] sm:$0xff]
      %v349 = vld [vmem:[#allocation2 + $0x1b0] sm:$0xff]
      %v350 = vld [vmem:[#allocation2 + $0x1e0] sm:$0xff]
      %v351 = vld [vmem:[#allocation2 + $0x1f0] sm:$0xff]
      %v352 = vld [vmem:[#allocation2 + $0x200] sm:$0xff]
      %v353 = vld [vmem:[#allocation2 + $0x210] sm:$0xff]
      %v354 = vld [vmem:[#allocation2 + $0x220] sm:$0xff]
      %v355 = vld [vmem:[#allocation2 + $0x230] sm:$0xff]
      %v356 = vld [vmem:[#allocation2 + $0x240] sm:$0xff]
      %v357 = vld [vmem:[#allocation2 + $0x250] sm:$0xff]
      %358 = vst.msk [vmem:[#allocation3] sm:$0xff] %vm179, %v326
      %359 = vst.msk [vmem:[#allocation3 + $0x8] sm:$0xff] %vm179, %v327
      %360 = vst.msk [vmem:[#allocation3 + $0x10] sm:$0xff] %vm179, %v328
      %361 = vst.msk [vmem:[#allocation3 + $0x18] sm:$0xff] %vm179, %v329
      %362 = vst.msk [vmem:[#allocation3 + $0x20] sm:$0xff] %vm179, %v330
      %363 = vst.msk [vmem:[#allocation3 + $0x28] sm:$0xff] %vm179, %v331
      %364 = vst.msk [vmem:[#allocation3 + $0x30] sm:$0xff] %vm179, %v332
      %365 = vst.msk [vmem:[#allocation3 + $0x38] sm:$0xff] %vm179, %v333
      %366 = vst.msk [vmem:[#allocation3 + $0x40] sm:$0xff] %vm179, %v334
      %367 = vst.msk [vmem:[#allocation3 + $0x48] sm:$0xff] %vm179, %v335
      %368 = vst.msk [vmem:[#allocation3 + $0x50] sm:$0xff] %vm179, %v336
      %369 = vst.msk [vmem:[#allocation3 + $0x58] sm:$0xff] %vm179, %v337
      %370 = vst.msk [vmem:[#allocation3 + $0x60] sm:$0xff] %vm179, %v338
      %371 = vst.msk [vmem:[#allocation3 + $0x68] sm:$0xff] %vm179, %v339
      %372 = vst.msk [vmem:[#allocation3 + $0x70] sm:$0xff] %vm179, %v340
      %373 = vst.msk [vmem:[#allocation3 + $0x78] sm:$0xff] %vm179, %v341
      %374 = vst.msk [vmem:[#allocation3 + $0x80] sm:$0xff] %vm179, %v342
      %375 = vst.msk [vmem:[#allocation3 + $0x88] sm:$0xff] %vm179, %v343
      %376 = vst.msk [vmem:[#allocation3 + $0x90] sm:$0xff] %vm179, %v344
      %377 = vst.msk [vmem:[#allocation3 + $0x98] sm:$0xff] %vm179, %v345
      %378 = vst.msk [vmem:[#allocation3 + $0xa0] sm:$0xff] %vm179, %v346
      %379 = vst.msk [vmem:[#allocation3 + $0xa8] sm:$0xff] %vm179, %v347
      %380 = vst.msk [vmem:[#allocation3 + $0xb0] sm:$0xff] %vm179, %v348
      %381 = vst.msk [vmem:[#allocation3 + $0xb8] sm:$0xff] %vm179, %v349
      %382 = vst.msk [vmem:[#allocation3 + $0xc0] sm:$0xff] %vm179, %v350
      %383 = vst.msk [vmem:[#allocation3 + $0xc8] sm:$0xff] %vm179, %v351
      %384 = vst.msk [vmem:[#allocation3 + $0xd0] sm:$0xff] %vm179, %v352
      %385 = vst.msk [vmem:[#allocation3 + $0xd8] sm:$0xff] %vm179, %v353
      %386 = vst.msk [vmem:[#allocation3 + $0xe0] sm:$0xff] %vm179, %v354
      %387 = vst.msk [vmem:[#allocation3 + $0xe8] sm:$0xff] %vm179, %v355
      %388 = vst.msk [vmem:[#allocation3 + $0xf0] sm:$0xff] %vm179, %v356
      %389 = vst.msk [vmem:[#allocation3 + $0xf8] sm:$0xff] %vm179, %v357
      %v390 = vld [vmem:[#allocation2 + $0x1] sm:$0xff]
      %v391 = vld [vmem:[#allocation2 + $0x11] sm:$0xff]
      %v392 = vld [vmem:[#allocation2 + $0x21] sm:$0xff]
      %v393 = vld [vmem:[#allocation2 + $0x31] sm:$0xff]
      %v394 = vld [vmem:[#allocation2 + $0x41] sm:$0xff]
      %v395 = vld [vmem:[#allocation2 + $0x51] sm:$0xff]
      %v396 = vld [vmem:[#allocation2 + $0x61] sm:$0xff]
      %v397 = vld [vmem:[#allocation2 + $0x71] sm:$0xff]
      %v398 = vld [vmem:[#allocation2 + $0xa1] sm:$0xff]
      %v399 = vld [vmem:[#allocation2 + $0xb1] sm:$0xff]
      %v400 = vld [vmem:[#allocation2 + $0xc1] sm:$0xff]
      %v401 = vld [vmem:[#allocation2 + $0xd1] sm:$0xff]
      %v402 = vld [vmem:[#allocation2 + $0xe1] sm:$0xff]
      %v403 = vld [vmem:[#allocation2 + $0xf1] sm:$0xff]
      %v404 = vld [vmem:[#allocation2 + $0x101] sm:$0xff]
      %v405 = vld [vmem:[#allocation2 + $0x111] sm:$0xff]
      %v406 = vld [vmem:[#allocation2 + $0x141] sm:$0xff]
      %v407 = vld [vmem:[#allocation2 + $0x151] sm:$0xff]
      %v408 = vld [vmem:[#allocation2 + $0x161] sm:$0xff]
      %v409 = vld [vmem:[#allocation2 + $0x171] sm:$0xff]
      %v410 = vld [vmem:[#allocation2 + $0x181] sm:$0xff]
      %v411 = vld [vmem:[#allocation2 + $0x191] sm:$0xff]
      %v412 = vld [vmem:[#allocation2 + $0x1a1] sm:$0xff]
      %v413 = vld [vmem:[#allocation2 + $0x1b1] sm:$0xff]
      %v414 = vld [vmem:[#allocation2 + $0x1e1] sm:$0xff]
      %v415 = vld [vmem:[#allocation2 + $0x1f1] sm:$0xff]
      %v416 = vld [vmem:[#allocation2 + $0x201] sm:$0xff]
      %v417 = vld [vmem:[#allocation2 + $0x211] sm:$0xff]
      %v418 = vld [vmem:[#allocation2 + $0x221] sm:$0xff]
      %v419 = vld [vmem:[#allocation2 + $0x231] sm:$0xff]
      %v420 = vld [vmem:[#allocation2 + $0x241] sm:$0xff]
      %v421 = vld [vmem:[#allocation2 + $0x251] sm:$0xff]
      %454 = vrot.lane.b32.xlu0 %v390, 4
      %v455 = vpop.permute.xlu0 %454
      %456 = vrot.lane.b32.xlu0 %v391, 4
      %v457 = vpop.permute.xlu0 %456
      %458 = vrot.lane.b32.xlu0 %v392, 4
      %v459 = vpop.permute.xlu0 %458
      %460 = vrot.lane.b32.xlu0 %v393, 4
      %v461 = vpop.permute.xlu0 %460
      %462 = vrot.lane.b32.xlu0 %v394, 4
      %v463 = vpop.permute.xlu0 %462
      %464 = vrot.lane.b32.xlu0 %v395, 4
      %v465 = vpop.permute.xlu0 %464
      %466 = vrot.lane.b32.xlu0 %v396, 4
      %v467 = vpop.permute.xlu0 %466
      %468 = vrot.lane.b32.xlu0 %v397, 4
      %v469 = vpop.permute.xlu0 %468
      %470 = vrot.lane.b32.xlu0 %v398, 4
      %v471 = vpop.permute.xlu0 %470
      %472 = vrot.lane.b32.xlu0 %v399, 4
      %v473 = vpop.permute.xlu0 %472
      %474 = vrot.lane.b32.xlu0 %v400, 4
      %v475 = vpop.permute.xlu0 %474
      %476 = vrot.lane.b32.xlu0 %v401, 4
      %v477 = vpop.permute.xlu0 %476
      %478 = vrot.lane.b32.xlu0 %v402, 4
      %v479 = vpop.permute.xlu0 %478
      %480 = vrot.lane.b32.xlu0 %v403, 4
      %v481 = vpop.permute.xlu0 %480
      %482 = vrot.lane.b32.xlu0 %v404, 4
      %v483 = vpop.permute.xlu0 %482
      %484 = vrot.lane.b32.xlu0 %v405, 4
      %v485 = vpop.permute.xlu0 %484
      %486 = vrot.lane.b32.xlu0 %v406, 4
      %v487 = vpop.permute.xlu0 %486
      %488 = vrot.lane.b32.xlu0 %v407, 4
      %v489 = vpop.permute.xlu0 %488
      %490 = vrot.lane.b32.xlu0 %v408, 4
      %v491 = vpop.permute.xlu0 %490
      %492 = vrot.lane.b32.xlu0 %v409, 4
      %v493 = vpop.permute.xlu0 %492
      %494 = vrot.lane.b32.xlu0 %v410, 4
      %v495 = vpop.permute.xlu0 %494
      %496 = vrot.lane.b32.xlu0 %v411, 4
      %v497 = vpop.permute.xlu0 %496
      %498 = vrot.lane.b32.xlu0 %v412, 4
      %v499 = vpop.permute.xlu0 %498
      %500 = vrot.lane.b32.xlu0 %v413, 4
      %v501 = vpop.permute.xlu0 %500
      %502 = vrot.lane.b32.xlu0 %v414, 4
      %v503 = vpop.permute.xlu0 %502
      %504 = vrot.lane.b32.xlu0 %v415, 4
      %v505 = vpop.permute.xlu0 %504
      %506 = vrot.lane.b32.xlu0 %v416, 4
      %v507 = vpop.permute.xlu0 %506
      %508 = vrot.lane.b32.xlu0 %v417, 4
      %v509 = vpop.permute.xlu0 %508
      %510 = vrot.lane.b32.xlu0 %v418, 4
      %v511 = vpop.permute.xlu0 %510
      %512 = vrot.lane.b32.xlu0 %v419, 4
      %v513 = vpop.permute.xlu0 %512
      %514 = vrot.lane.b32.xlu0 %v420, 4
      %v515 = vpop.permute.xlu0 %514
      %516 = vrot.lane.b32.xlu0 %v421, 4
      %v517 = vpop.permute.xlu0 %516
      %vm550 = vcmask 64544
      %551 = vst.msk [vmem:[#allocation3] sm:$0xff] %vm550, %v455
      %552 = vst.msk [vmem:[#allocation3 + $0x8] sm:$0xff] %vm550, %v457
      %553 = vst.msk [vmem:[#allocation3 + $0x10] sm:$0xff] %vm550, %v459
      %554 = vst.msk [vmem:[#allocation3 + $0x18] sm:$0xff] %vm550, %v461
      %555 = vst.msk [vmem:[#allocation3 + $0x20] sm:$0xff] %vm550, %v463
      %556 = vst.msk [vmem:[#allocation3 + $0x28] sm:$0xff] %vm550, %v465
      %557 = vst.msk [vmem:[#allocation3 + $0x30] sm:$0xff] %vm550, %v467
      %558 = vst.msk [vmem:[#allocation3 + $0x38] sm:$0xff] %vm550, %v469
      %559 = vst.msk [vmem:[#allocation3 + $0x40] sm:$0xff] %vm550, %v471
      %560 = vst.msk [vmem:[#allocation3 + $0x48] sm:$0xff] %vm550, %v473
      %561 = vst.msk [vmem:[#allocation3 + $0x50] sm:$0xff] %vm550, %v475
      %562 = vst.msk [vmem:[#allocation3 + $0x58] sm:$0xff] %vm550, %v477
      %563 = vst.msk [vmem:[#allocation3 + $0x60] sm:$0xff] %vm550, %v479
      %564 = vst.msk [vmem:[#allocation3 + $0x68] sm:$0xff] %vm550, %v481
      %565 = vst.msk [vmem:[#allocation3 + $0x70] sm:$0xff] %vm550, %v483
      %566 = vst.msk [vmem:[#allocation3 + $0x78] sm:$0xff] %vm550, %v485
      %567 = vst.msk [vmem:[#allocation3 + $0x80] sm:$0xff] %vm550, %v487
      %568 = vst.msk [vmem:[#allocation3 + $0x88] sm:$0xff] %vm550, %v489
      %569 = vst.msk [vmem:[#allocation3 + $0x90] sm:$0xff] %vm550, %v491
      %570 = vst.msk [vmem:[#allocation3 + $0x98] sm:$0xff] %vm550, %v493
      %571 = vst.msk [vmem:[#allocation3 + $0xa0] sm:$0xff] %vm550, %v495
      %572 = vst.msk [vmem:[#allocation3 + $0xa8] sm:$0xff] %vm550, %v497
      %573 = vst.msk [vmem:[#allocation3 + $0xb0] sm:$0xff] %vm550, %v499
      %574 = vst.msk [vmem:[#allocation3 + $0xb8] sm:$0xff] %vm550, %v501
      %575 = vst.msk [vmem:[#allocation3 + $0xc0] sm:$0xff] %vm550, %v503
      %576 = vst.msk [vmem:[#allocation3 + $0xc8] sm:$0xff] %vm550, %v505
      %577 = vst.msk [vmem:[#allocation3 + $0xd0] sm:$0xff] %vm550, %v507
      %578 = vst.msk [vmem:[#allocation3 + $0xd8] sm:$0xff] %vm550, %v509
      %579 = vst.msk [vmem:[#allocation3 + $0xe0] sm:$0xff] %vm550, %v511
      %580 = vst.msk [vmem:[#allocation3 + $0xe8] sm:$0xff] %vm550, %v513
      %581 = vst.msk [vmem:[#allocation3 + $0xf0] sm:$0xff] %vm550, %v515
      %582 = vst.msk [vmem:[#allocation3 + $0xf8] sm:$0xff] %vm550, %v517
      %v583 = vld [vmem:[#allocation2 + $0x2] sm:$0xff]
      %v584 = vld [vmem:[#allocation2 + $0x12] sm:$0xff]
      %v585 = vld [vmem:[#allocation2 + $0x22] sm:$0xff]
      %v586 = vld [vmem:[#allocation2 + $0x32] sm:$0xff]
      %v587 = vld [vmem:[#allocation2 + $0x42] sm:$0xff]
      %v588 = vld [vmem:[#allocation2 + $0x52] sm:$0xff]
      %v589 = vld [vmem:[#allocation2 + $0x62] sm:$0xff]
      %v590 = vld [vmem:[#allocation2 + $0x72] sm:$0xff]
      %v591 = vld [vmem:[#allocation2 + $0xa2] sm:$0xff]
      %v592 = vld [vmem:[#allocation2 + $0xb2] sm:$0xff]
      %v593 = vld [vmem:[#allocation2 + $0xc2] sm:$0xff]
      %v594 = vld [vmem:[#allocation2 + $0xd2] sm:$0xff]
      %v595 = vld [vmem:[#allocation2 + $0xe2] sm:$0xff]
      %v596 = vld [vmem:[#allocation2 + $0xf2] sm:$0xff]
      %v597 = vld [vmem:[#allocation2 + $0x102] sm:$0xff]
      %v598 = vld [vmem:[#allocation2 + $0x112] sm:$0xff]
      %v599 = vld [vmem:[#allocation2 + $0x142] sm:$0xff]
      %v600 = vld [vmem:[#allocation2 + $0x152] sm:$0xff]
      %v601 = vld [vmem:[#allocation2 + $0x162] sm:$0xff]
      %v602 = vld [vmem:[#allocation2 + $0x172] sm:$0xff]
      %v603 = vld [vmem:[#allocation2 + $0x182] sm:$0xff]
      %v604 = vld [vmem:[#allocation2 + $0x192] sm:$0xff]
      %v605 = vld [vmem:[#allocation2 + $0x1a2] sm:$0xff]
      %v606 = vld [vmem:[#allocation2 + $0x1b2] sm:$0xff]
      %v607 = vld [vmem:[#allocation2 + $0x1e2] sm:$0xff]
      %v608 = vld [vmem:[#allocation2 + $0x1f2] sm:$0xff]
      %v609 = vld [vmem:[#allocation2 + $0x202] sm:$0xff]
      %v610 = vld [vmem:[#allocation2 + $0x212] sm:$0xff]
      %v611 = vld [vmem:[#allocation2 + $0x222] sm:$0xff]
      %v612 = vld [vmem:[#allocation2 + $0x232] sm:$0xff]
      %v613 = vld [vmem:[#allocation2 + $0x242] sm:$0xff]
      %v614 = vld [vmem:[#allocation2 + $0x252] sm:$0xff]
      %647 = vrot.lane.b32.xlu0 %v583, 8
      %v648 = vpop.permute.xlu0 %647
      %649 = vrot.lane.b32.xlu0 %v584, 8
      %v650 = vpop.permute.xlu0 %649
      %651 = vrot.lane.b32.xlu0 %v585, 8
      %v652 = vpop.permute.xlu0 %651
      %653 = vrot.lane.b32.xlu0 %v586, 8
      %v654 = vpop.permute.xlu0 %653
      %655 = vrot.lane.b32.xlu0 %v587, 8
      %v656 = vpop.permute.xlu0 %655
      %657 = vrot.lane.b32.xlu0 %v588, 8
      %v658 = vpop.permute.xlu0 %657
      %659 = vrot.lane.b32.xlu0 %v589, 8
      %v660 = vpop.permute.xlu0 %659
      %661 = vrot.lane.b32.xlu0 %v590, 8
      %v662 = vpop.permute.xlu0 %661
      %663 = vrot.lane.b32.xlu0 %v591, 8
      %v664 = vpop.permute.xlu0 %663
      %665 = vrot.lane.b32.xlu0 %v592, 8
      %v666 = vpop.permute.xlu0 %665
      %667 = vrot.lane.b32.xlu0 %v593, 8
      %v668 = vpop.permute.xlu0 %667
      %669 = vrot.lane.b32.xlu0 %v594, 8
      %v670 = vpop.permute.xlu0 %669
      %671 = vrot.lane.b32.xlu0 %v595, 8
      %v672 = vpop.permute.xlu0 %671
      %673 = vrot.lane.b32.xlu0 %v596, 8
      %v674 = vpop.permute.xlu0 %673
      %675 = vrot.lane.b32.xlu0 %v597, 8
      %v676 = vpop.permute.xlu0 %675
      %677 = vrot.lane.b32.xlu0 %v598, 8
      %v678 = vpop.permute.xlu0 %677
      %679 = vrot.lane.b32.xlu0 %v599, 8
      %v680 = vpop.permute.xlu0 %679
      %681 = vrot.lane.b32.xlu0 %v600, 8
      %v682 = vpop.permute.xlu0 %681
      %683 = vrot.lane.b32.xlu0 %v601, 8
      %v684 = vpop.permute.xlu0 %683
      %685 = vrot.lane.b32.xlu0 %v602, 8
      %v686 = vpop.permute.xlu0 %685
      %687 = vrot.lane.b32.xlu0 %v603, 8
      %v688 = vpop.permute.xlu0 %687
      %689 = vrot.lane.b32.xlu0 %v604, 8
      %v690 = vpop.permute.xlu0 %689
      %691 = vrot.lane.b32.xlu0 %v605, 8
      %v692 = vpop.permute.xlu0 %691
      %693 = vrot.lane.b32.xlu0 %v606, 8
      %v694 = vpop.permute.xlu0 %693
      %695 = vrot.lane.b32.xlu0 %v607, 8
      %v696 = vpop.permute.xlu0 %695
      %697 = vrot.lane.b32.xlu0 %v608, 8
      %v698 = vpop.permute.xlu0 %697
      %699 = vrot.lane.b32.xlu0 %v609, 8
      %v700 = vpop.permute.xlu0 %699
      %701 = vrot.lane.b32.xlu0 %v610, 8
      %v702 = vpop.permute.xlu0 %701
      %703 = vrot.lane.b32.xlu0 %v611, 8
      %v704 = vpop.permute.xlu0 %703
      %705 = vrot.lane.b32.xlu0 %v612, 8
      %v706 = vpop.permute.xlu0 %705
      %707 = vrot.lane.b32.xlu0 %v613, 8
      %v708 = vpop.permute.xlu0 %707
      %709 = vrot.lane.b32.xlu0 %v614, 8
      %v710 = vpop.permute.xlu0 %709
      %vm743 = vcmask 97344
      %744 = vst.msk [vmem:[#allocation3] sm:$0xff] %vm743, %v648
      %745 = vst.msk [vmem:[#allocation3 + $0x8] sm:$0xff] %vm743, %v650
      %746 = vst.msk [vmem:[#allocation3 + $0x10] sm:$0xff] %vm743, %v652
      %747 = vst.msk [vmem:[#allocation3 + $0x18] sm:$0xff] %vm743, %v654
      %748 = vst.msk [vmem:[#allocation3 + $0x20] sm:$0xff] %vm743, %v656
      %749 = vst.msk [vmem:[#allocation3 + $0x28] sm:$0xff] %vm743, %v658
      %750 = vst.msk [vmem:[#allocation3 + $0x30] sm:$0xff] %vm743, %v660
      %751 = vst.msk [vmem:[#allocation3 + $0x38] sm:$0xff] %vm743, %v662
      %752 = vst.msk [vmem:[#allocation3 + $0x40] sm:$0xff] %vm743, %v664
      %753 = vst.msk [vmem:[#allocation3 + $0x48] sm:$0xff] %vm743, %v666
      %754 = vst.msk [vmem:[#allocation3 + $0x50] sm:$0xff] %vm743, %v668
      %755 = vst.msk [vmem:[#allocation3 + $0x58] sm:$0xff] %vm743, %v670
      %756 = vst.msk [vmem:[#allocation3 + $0x60] sm:$0xff] %vm743, %v672
      %757 = vst.msk [vmem:[#allocation3 + $0x68] sm:$0xff] %vm743, %v674
      %758 = vst.msk [vmem:[#allocation3 + $0x70] sm:$0xff] %vm743, %v676
      %759 = vst.msk [vmem:[#allocation3 + $0x78] sm:$0xff] %vm743, %v678
      %760 = vst.msk [vmem:[#allocation3 + $0x80] sm:$0xff] %vm743, %v680
      %761 = vst.msk [vmem:[#allocation3 + $0x88] sm:$0xff] %vm743, %v682
      %762 = vst.msk [vmem:[#allocation3 + $0x90] sm:$0xff] %vm743, %v684
      %763 = vst.msk [vmem:[#allocation3 + $0x98] sm:$0xff] %vm743, %v686
      %764 = vst.msk [vmem:[#allocation3 + $0xa0] sm:$0xff] %vm743, %v688
      %765 = vst.msk [vmem:[#allocation3 + $0xa8] sm:$0xff] %vm743, %v690
      %766 = vst.msk [vmem:[#allocation3 + $0xb0] sm:$0xff] %vm743, %v692
      %767 = vst.msk [vmem:[#allocation3 + $0xb8] sm:$0xff] %vm743, %v694
      %768 = vst.msk [vmem:[#allocation3 + $0xc0] sm:$0xff] %vm743, %v696
      %769 = vst.msk [vmem:[#allocation3 + $0xc8] sm:$0xff] %vm743, %v698
      %770 = vst.msk [vmem:[#allocation3 + $0xd0] sm:$0xff] %vm743, %v700
      %771 = vst.msk [vmem:[#allocation3 + $0xd8] sm:$0xff] %vm743, %v702
      %772 = vst.msk [vmem:[#allocation3 + $0xe0] sm:$0xff] %vm743, %v704
      %773 = vst.msk [vmem:[#allocation3 + $0xe8] sm:$0xff] %vm743, %v706
      %774 = vst.msk [vmem:[#allocation3 + $0xf0] sm:$0xff] %vm743, %v708
      %775 = vst.msk [vmem:[#allocation3 + $0xf8] sm:$0xff] %vm743, %v710
      %v776 = vld [vmem:[%s293] sm:$0xff]
      %v777 = vld [vmem:[%s293 + $0x10] sm:$0xff]
      %v778 = vld [vmem:[%s293 + $0x20] sm:$0xff]
      %v779 = vld [vmem:[%s293 + $0x30] sm:$0xff]
      %v780 = vld [vmem:[%s293 + $0x40] sm:$0xff]
      %v781 = vld [vmem:[%s293 + $0x50] sm:$0xff]
      %v782 = vld [vmem:[%s293 + $0x60] sm:$0xff]
      %v783 = vld [vmem:[%s293 + $0x70] sm:$0xff]
      %v784 = vld [vmem:[%s293 + $0xa0] sm:$0xff]
      %v785 = vld [vmem:[%s293 + $0xb0] sm:$0xff]
      %v786 = vld [vmem:[%s293 + $0xc0] sm:$0xff]
      %v787 = vld [vmem:[%s293 + $0xd0] sm:$0xff]
      %v788 = vld [vmem:[%s293 + $0xe0] sm:$0xff]
      %v789 = vld [vmem:[%s293 + $0xf0] sm:$0xff]
      %v790 = vld [vmem:[%s293 + $0x100] sm:$0xff]
      %v791 = vld [vmem:[%s293 + $0x110] sm:$0xff]
      %v792 = vld [vmem:[%s293 + $0x140] sm:$0xff]
      %v793 = vld [vmem:[%s293 + $0x150] sm:$0xff]
      %v794 = vld [vmem:[%s293 + $0x160] sm:$0xff]
      %v795 = vld [vmem:[%s293 + $0x170] sm:$0xff]
      %v796 = vld [vmem:[%s293 + $0x180] sm:$0xff]
      %v797 = vld [vmem:[%s293 + $0x190] sm:$0xff]
      %v798 = vld [vmem:[%s293 + $0x1a0] sm:$0xff]
      %v799 = vld [vmem:[%s293 + $0x1b0] sm:$0xff]
      %v800 = vld [vmem:[%s293 + $0x1e0] sm:$0xff]
      %v801 = vld [vmem:[%s293 + $0x1f0] sm:$0xff]
      %v802 = vld [vmem:[%s293 + $0x200] sm:$0xff]
      %v803 = vld [vmem:[%s293 + $0x210] sm:$0xff]
      %v804 = vld [vmem:[%s293 + $0x220] sm:$0xff]
      %v805 = vld [vmem:[%s293 + $0x230] sm:$0xff]
      %v806 = vld [vmem:[%s293 + $0x240] sm:$0xff]
      %v807 = vld [vmem:[%s293 + $0x250] sm:$0xff]
      %840 = vrot.lane.b32.xlu0 %v776, 12
      %v841 = vpop.permute.xlu0 %840
      %842 = vrot.lane.b32.xlu0 %v777, 12
      %v843 = vpop.permute.xlu0 %842
      %844 = vrot.lane.b32.xlu0 %v778, 12
      %v845 = vpop.permute.xlu0 %844
      %846 = vrot.lane.b32.xlu0 %v779, 12
      %v847 = vpop.permute.xlu0 %846
      %848 = vrot.lane.b32.xlu0 %v780, 12
      %v849 = vpop.permute.xlu0 %848
      %850 = vrot.lane.b32.xlu0 %v781, 12
      %v851 = vpop.permute.xlu0 %850
      %852 = vrot.lane.b32.xlu0 %v782, 12
      %v853 = vpop.permute.xlu0 %852
      %854 = vrot.lane.b32.xlu0 %v783, 12
      %v855 = vpop.permute.xlu0 %854
      %856 = vrot.lane.b32.xlu0 %v784, 12
      %v857 = vpop.permute.xlu0 %856
      %858 = vrot.lane.b32.xlu0 %v785, 12
      %v859 = vpop.permute.xlu0 %858
      %860 = vrot.lane.b32.xlu0 %v786, 12
      %v861 = vpop.permute.xlu0 %860
      %862 = vrot.lane.b32.xlu0 %v787, 12
      %v863 = vpop.permute.xlu0 %862
      %864 = vrot.lane.b32.xlu0 %v788, 12
      %v865 = vpop.permute.xlu0 %864
      %866 = vrot.lane.b32.xlu0 %v789, 12
      %v867 = vpop.permute.xlu0 %866
      %868 = vrot.lane.b32.xlu0 %v790, 12
      %v869 = vpop.permute.xlu0 %868
      %870 = vrot.lane.b32.xlu0 %v791, 12
      %v871 = vpop.permute.xlu0 %870
      %872 = vrot.lane.b32.xlu0 %v792, 12
      %v873 = vpop.permute.xlu0 %872
      %874 = vrot.lane.b32.xlu0 %v793, 12
      %v875 = vpop.permute.xlu0 %874
      %876 = vrot.lane.b32.xlu0 %v794, 12
      %v877 = vpop.permute.xlu0 %876
      %878 = vrot.lane.b32.xlu0 %v795, 12
      %v879 = vpop.permute.xlu0 %878
      %880 = vrot.lane.b32.xlu0 %v796, 12
      %v881 = vpop.permute.xlu0 %880
      %882 = vrot.lane.b32.xlu0 %v797, 12
      %v883 = vpop.permute.xlu0 %882
      %884 = vrot.lane.b32.xlu0 %v798, 12
      %v885 = vpop.permute.xlu0 %884
      %886 = vrot.lane.b32.xlu0 %v799, 12
      %v887 = vpop.permute.xlu0 %886
      %888 = vrot.lane.b32.xlu0 %v800, 12
      %v889 = vpop.permute.xlu0 %888
      %890 = vrot.lane.b32.xlu0 %v801, 12
      %v891 = vpop.permute.xlu0 %890
      %892 = vrot.lane.b32.xlu0 %v802, 12
      %v893 = vpop.permute.xlu0 %892
      %894 = vrot.lane.b32.xlu0 %v803, 12
      %v895 = vpop.permute.xlu0 %894
      %896 = vrot.lane.b32.xlu0 %v804, 12
      %v897 = vpop.permute.xlu0 %896
      %898 = vrot.lane.b32.xlu0 %v805, 12
      %v899 = vpop.permute.xlu0 %898
      %900 = vrot.lane.b32.xlu0 %v806, 12
      %v901 = vpop.permute.xlu0 %900
      %902 = vrot.lane.b32.xlu0 %v807, 12
      %v903 = vpop.permute.xlu0 %902
      %vm936 = vcmask 130144
      %937 = vst.msk [vmem:[#allocation3] sm:$0xff] %vm936, %v841
      %938 = vst.msk [vmem:[#allocation3 + $0x8] sm:$0xff] %vm936, %v843
      %939 = vst.msk [vmem:[#allocation3 + $0x10] sm:$0xff] %vm936, %v845
      %940 = vst.msk [vmem:[#allocation3 + $0x18] sm:$0xff] %vm936, %v847
      %941 = vst.msk [vmem:[#allocation3 + $0x20] sm:$0xff] %vm936, %v849
      %942 = vst.msk [vmem:[#allocation3 + $0x28] sm:$0xff] %vm936, %v851
      %943 = vst.msk [vmem:[#allocation3 + $0x30] sm:$0xff] %vm936, %v853
      %944 = vst.msk [vmem:[#allocation3 + $0x38] sm:$0xff] %vm936, %v855
      %945 = vst.msk [vmem:[#allocation3 + $0x40] sm:$0xff] %vm936, %v857
      %946 = vst.msk [vmem:[#allocation3 + $0x48] sm:$0xff] %vm936, %v859
      %947 = vst.msk [vmem:[#allocation3 + $0x50] sm:$0xff] %vm936, %v861
      %948 = vst.msk [vmem:[#allocation3 + $0x58] sm:$0xff] %vm936, %v863
      %949 = vst.msk [vmem:[#allocation3 + $0x60] sm:$0xff] %vm936, %v865
      %950 = vst.msk [vmem:[#allocation3 + $0x68] sm:$0xff] %vm936, %v867
      %951 = vst.msk [vmem:[#allocation3 + $0x70] sm:$0xff] %vm936, %v869
      %952 = vst.msk [vmem:[#allocation3 + $0x78] sm:$0xff] %vm936, %v871
      %953 = vst.msk [vmem:[#allocation3 + $0x80] sm:$0xff] %vm936, %v873
      %954 = vst.msk [vmem:[#allocation3 + $0x88] sm:$0xff] %vm936, %v875
      %955 = vst.msk [vmem:[#allocation3 + $0x90] sm:$0xff] %vm936, %v877
      %956 = vst.msk [vmem:[#allocation3 + $0x98] sm:$0xff] %vm936, %v879
      %957 = vst.msk [vmem:[#allocation3 + $0xa0] sm:$0xff] %vm936, %v881
      %958 = vst.msk [vmem:[#allocation3 + $0xa8] sm:$0xff] %vm936, %v883
      %959 = vst.msk [vmem:[#allocation3 + $0xb0] sm:$0xff] %vm936, %v885
      %960 = vst.msk [vmem:[#allocation3 + $0xb8] sm:$0xff] %vm936, %v887
      %961 = vst.msk [vmem:[#allocation3 + $0xc0] sm:$0xff] %vm936, %v889
      %962 = vst.msk [vmem:[#allocation3 + $0xc8] sm:$0xff] %vm936, %v891
      %963 = vst.msk [vmem:[#allocation3 + $0xd0] sm:$0xff] %vm936, %v893
      %964 = vst.msk [vmem:[#allocation3 + $0xd8] sm:$0xff] %vm936, %v895
      %965 = vst.msk [vmem:[#allocation3 + $0xe0] sm:$0xff] %vm936, %v897
      %966 = vst.msk [vmem:[#allocation3 + $0xe8] sm:$0xff] %vm936, %v899
      %967 = vst.msk [vmem:[#allocation3 + $0xf0] sm:$0xff] %vm936, %v901
      %968 = vst.msk [vmem:[#allocation3 + $0xf8] sm:$0xff] %vm936, %v903
      %v969 = vld [vmem:[%s293 + $0x1] sm:$0xff]
      %v970 = vld [vmem:[%s293 + $0x11] sm:$0xff]
      %v971 = vld [vmem:[%s293 + $0x21] sm:$0xff]
      %v972 = vld [vmem:[%s293 + $0x31] sm:$0xff]
      %v973 = vld [vmem:[%s293 + $0x41] sm:$0xff]
      %v974 = vld [vmem:[%s293 + $0x51] sm:$0xff]
      %v975 = vld [vmem:[%s293 + $0x61] sm:$0xff]
      %v976 = vld [vmem:[%s293 + $0x71] sm:$0xff]
      %v977 = vld [vmem:[%s293 + $0xa1] sm:$0xff]
      %v978 = vld [vmem:[%s293 + $0xb1] sm:$0xff]
      %v979 = vld [vmem:[%s293 + $0xc1] sm:$0xff]
      %v980 = vld [vmem:[%s293 + $0xd1] sm:$0xff]
      %v981 = vld [vmem:[%s293 + $0xe1] sm:$0xff]
      %v982 = vld [vmem:[%s293 + $0xf1] sm:$0xff]
      %v983 = vld [vmem:[%s293 + $0x101] sm:$0xff]
      %v984 = vld [vmem:[%s293 + $0x111] sm:$0xff]
      %v985 = vld [vmem:[%s293 + $0x141] sm:$0xff]
      %v986 = vld [vmem:[%s293 + $0x151] sm:$0xff]
      %v987 = vld [vmem:[%s293 + $0x161] sm:$0xff]
      %v988 = vld [vmem:[%s293 + $0x171] sm:$0xff]
      %v989 = vld [vmem:[%s293 + $0x181] sm:$0xff]
      %v990 = vld [vmem:[%s293 + $0x191] sm:$0xff]
      %v991 = vld [vmem:[%s293 + $0x1a1] sm:$0xff]
      %v992 = vld [vmem:[%s293 + $0x1b1] sm:$0xff]
      %v993 = vld [vmem:[%s293 + $0x1e1] sm:$0xff]
      %v994 = vld [vmem:[%s293 + $0x1f1] sm:$0xff]
      %v995 = vld [vmem:[%s293 + $0x201] sm:$0xff]
      %v996 = vld [vmem:[%s293 + $0x211] sm:$0xff]
      %v997 = vld [vmem:[%s293 + $0x221] sm:$0xff]
      %v998 = vld [vmem:[%s293 + $0x231] sm:$0xff]
      %v999 = vld [vmem:[%s293 + $0x241] sm:$0xff]
      %v1000 = vld [vmem:[%s293 + $0x251] sm:$0xff]
      %1033 = vrot.lane.b32.xlu0 %v969, 16
      %v1034 = vpop.permute.xlu0 %1033
      %1035 = vrot.lane.b32.xlu0 %v970, 16
      %v1036 = vpop.permute.xlu0 %1035
      %1037 = vrot.lane.b32.xlu0 %v971, 16
      %v1038 = vpop.permute.xlu0 %1037
      %1039 = vrot.lane.b32.xlu0 %v972, 16
      %v1040 = vpop.permute.xlu0 %1039
      %1041 = vrot.lane.b32.xlu0 %v973, 16
      %v1042 = vpop.permute.xlu0 %1041
      %1043 = vrot.lane.b32.xlu0 %v974, 16
      %v1044 = vpop.permute.xlu0 %1043
      %1045 = vrot.lane.b32.xlu0 %v975, 16
      %v1046 = vpop.permute.xlu0 %1045
      %1047 = vrot.lane.b32.xlu0 %v976, 16
      %v1048 = vpop.permute.xlu0 %1047
      %1049 = vrot.lane.b32.xlu0 %v977, 16
      %v1050 = vpop.permute.xlu0 %1049
      %1051 = vrot.lane.b32.xlu0 %v978, 16
      %v1052 = vpop.permute.xlu0 %1051
      %1053 = vrot.lane.b32.xlu0 %v979, 16
      %v1054 = vpop.permute.xlu0 %1053
      %1055 = vrot.lane.b32.xlu0 %v980, 16
      %v1056 = vpop.permute.xlu0 %1055
      %1057 = vrot.lane.b32.xlu0 %v981, 16
      %v1058 = vpop.permute.xlu0 %1057
      %1059 = vrot.lane.b32.xlu0 %v982, 16
      %v1060 = vpop.permute.xlu0 %1059
      %1061 = vrot.lane.b32.xlu0 %v983, 16
      %v1062 = vpop.permute.xlu0 %1061
      %1063 = vrot.lane.b32.xlu0 %v984, 16
      %v1064 = vpop.permute.xlu0 %1063
      %1065 = vrot.lane.b32.xlu0 %v985, 16
      %v1066 = vpop.permute.xlu0 %1065
      %1067 = vrot.lane.b32.xlu0 %v986, 16
      %v1068 = vpop.permute.xlu0 %1067
      %1069 = vrot.lane.b32.xlu0 %v987, 16
      %v1070 = vpop.permute.xlu0 %1069
      %1071 = vrot.lane.b32.xlu0 %v988, 16
      %v1072 = vpop.permute.xlu0 %1071
      %1073 = vrot.lane.b32.xlu0 %v989, 16
      %v1074 = vpop.permute.xlu0 %1073
      %1075 = vrot.lane.b32.xlu0 %v990, 16
      %v1076 = vpop.permute.xlu0 %1075
      %1077 = vrot.lane.b32.xlu0 %v991, 16
      %v1078 = vpop.permute.xlu0 %1077
      %1079 = vrot.lane.b32.xlu0 %v992, 16
      %v1080 = vpop.permute.xlu0 %1079
      %1081 = vrot.lane.b32.xlu0 %v993, 16
      %v1082 = vpop.permute.xlu0 %1081
      %1083 = vrot.lane.b32.xlu0 %v994, 16
      %v1084 = vpop.permute.xlu0 %1083
      %1085 = vrot.lane.b32.xlu0 %v995, 16
      %v1086 = vpop.permute.xlu0 %1085
      %1087 = vrot.lane.b32.xlu0 %v996, 16
      %v1088 = vpop.permute.xlu0 %1087
      %1089 = vrot.lane.b32.xlu0 %v997, 16
      %v1090 = vpop.permute.xlu0 %1089
      %1091 = vrot.lane.b32.xlu0 %v998, 16
      %v1092 = vpop.permute.xlu0 %1091
      %1093 = vrot.lane.b32.xlu0 %v999, 16
      %v1094 = vpop.permute.xlu0 %1093
      %1095 = vrot.lane.b32.xlu0 %v1000, 16
      %v1096 = vpop.permute.xlu0 %1095
      %vm1129 = vcmask 162944
      %1130 = vst.msk [vmem:[#allocation3] sm:$0xff] %vm1129, %v1034
      %1131 = vst.msk [vmem:[#allocation3 + $0x8] sm:$0xff] %vm1129, %v1036
      %1132 = vst.msk [vmem:[#allocation3 + $0x10] sm:$0xff] %vm1129, %v1038
      %1133 = vst.msk [vmem:[#allocation3 + $0x18] sm:$0xff] %vm1129, %v1040
      %1134 = vst.msk [vmem:[#allocation3 + $0x20] sm:$0xff] %vm1129, %v1042
      %1135 = vst.msk [vmem:[#allocation3 + $0x28] sm:$0xff] %vm1129, %v1044
      %1136 = vst.msk [vmem:[#allocation3 + $0x30] sm:$0xff] %vm1129, %v1046
      %1137 = vst.msk [vmem:[#allocation3 + $0x38] sm:$0xff] %vm1129, %v1048
      %1138 = vst.msk [vmem:[#allocation3 + $0x40] sm:$0xff] %vm1129, %v1050
      %1139 = vst.msk [vmem:[#allocation3 + $0x48] sm:$0xff] %vm1129, %v1052
      %1140 = vst.msk [vmem:[#allocation3 + $0x50] sm:$0xff] %vm1129, %v1054
      %1141 = vst.msk [vmem:[#allocation3 + $0x58] sm:$0xff] %vm1129, %v1056
      %1142 = vst.msk [vmem:[#allocation3 + $0x60] sm:$0xff] %vm1129, %v1058
      %1143 = vst.msk [vmem:[#allocation3 + $0x68] sm:$0xff] %vm1129, %v1060
      %1144 = vst.msk [vmem:[#allocation3 + $0x70] sm:$0xff] %vm1129, %v1062
      %1145 = vst.msk [vmem:[#allocation3 + $0x78] sm:$0xff] %vm1129, %v1064
      %1146 = vst.msk [vmem:[#allocation3 + $0x80] sm:$0xff] %vm1129, %v1066
      %1147 = vst.msk [vmem:[#allocation3 + $0x88] sm:$0xff] %vm1129, %v1068
      %1148 = vst.msk [vmem:[#allocation3 + $0x90] sm:$0xff] %vm1129, %v1070
      %1149 = vst.msk [vmem:[#allocation3 + $0x98] sm:$0xff] %vm1129, %v1072
      %1150 = vst.msk [vmem:[#allocation3 + $0xa0] sm:$0xff] %vm1129, %v1074
      %1151 = vst.msk [vmem:[#allocation3 + $0xa8] sm:$0xff] %vm1129, %v1076
      %1152 = vst.msk [vmem:[#allocation3 + $0xb0] sm:$0xff] %vm1129, %v1078
      %1153 = vst.msk [vmem:[#allocation3 + $0xb8] sm:$0xff] %vm1129, %v1080
      %1154 = vst.msk [vmem:[#allocation3 + $0xc0] sm:$0xff] %vm1129, %v1082
      %1155 = vst.msk [vmem:[#allocation3 + $0xc8] sm:$0xff] %vm1129, %v1084
      %1156 = vst.msk [vmem:[#allocation3 + $0xd0] sm:$0xff] %vm1129, %v1086
      %1157 = vst.msk [vmem:[#allocation3 + $0xd8] sm:$0xff] %vm1129, %v1088
      %1158 = vst.msk [vmem:[#allocation3 + $0xe0] sm:$0xff] %vm1129, %v1090
      %1159 = vst.msk [vmem:[#allocation3 + $0xe8] sm:$0xff] %vm1129, %v1092
      %1160 = vst.msk [vmem:[#allocation3 + $0xf0] sm:$0xff] %vm1129, %v1094
      %1161 = vst.msk [vmem:[#allocation3 + $0xf8] sm:$0xff] %vm1129, %v1096
      %v1162 = vld [vmem:[%s293 + $0x2] sm:$0xff]
      %v1163 = vld [vmem:[%s293 + $0x12] sm:$0xff]
      %v1164 = vld [vmem:[%s293 + $0x22] sm:$0xff]
      %v1165 = vld [vmem:[%s293 + $0x32] sm:$0xff]
      %v1166 = vld [vmem:[%s293 + $0x42] sm:$0xff]
      %v1167 = vld [vmem:[%s293 + $0x52] sm:$0xff]
      %v1168 = vld [vmem:[%s293 + $0x62] sm:$0xff]
      %v1169 = vld [vmem:[%s293 + $0x72] sm:$0xff]
      %v1170 = vld [vmem:[%s293 + $0xa2] sm:$0xff]
      %v1171 = vld [vmem:[%s293 + $0xb2] sm:$0xff]
      %v1172 = vld [vmem:[%s293 + $0xc2] sm:$0xff]
      %v1173 = vld [vmem:[%s293 + $0xd2] sm:$0xff]
      %v1174 = vld [vmem:[%s293 + $0xe2] sm:$0xff]
      %v1175 = vld [vmem:[%s293 + $0xf2] sm:$0xff]
      %v1176 = vld [vmem:[%s293 + $0x102] sm:$0xff]
      %v1177 = vld [vmem:[%s293 + $0x112] sm:$0xff]
      %v1178 = vld [vmem:[%s293 + $0x142] sm:$0xff]
      %v1179 = vld [vmem:[%s293 + $0x152] sm:$0xff]
      %v1180 = vld [vmem:[%s293 + $0x162] sm:$0xff]
      %v1181 = vld [vmem:[%s293 + $0x172] sm:$0xff]
      %v1182 = vld [vmem:[%s293 + $0x182] sm:$0xff]
      %v1183 = vld [vmem:[%s293 + $0x192] sm:$0xff]
      %v1184 = vld [vmem:[%s293 + $0x1a2] sm:$0xff]
      %v1185 = vld [vmem:[%s293 + $0x1b2] sm:$0xff]
      %v1186 = vld [vmem:[%s293 + $0x1e2] sm:$0xff]
      %v1187 = vld [vmem:[%s293 + $0x1f2] sm:$0xff]
      %v1188 = vld [vmem:[%s293 + $0x202] sm:$0xff]
      %v1189 = vld [vmem:[%s293 + $0x212] sm:$0xff]
      %v1190 = vld [vmem:[%s293 + $0x222] sm:$0xff]
      %v1191 = vld [vmem:[%s293 + $0x232] sm:$0xff]
      %v1192 = vld [vmem:[%s293 + $0x242] sm:$0xff]
      %v1193 = vld [vmem:[%s293 + $0x252] sm:$0xff]
      %1226 = vrot.lane.b32.xlu0 %v1162, 20
      %v1227 = vpop.permute.xlu0 %1226
      %1228 = vrot.lane.b32.xlu0 %v1163, 20
      %v1229 = vpop.permute.xlu0 %1228
      %1230 = vrot.lane.b32.xlu0 %v1164, 20
      %v1231 = vpop.permute.xlu0 %1230
      %1232 = vrot.lane.b32.xlu0 %v1165, 20
      %v1233 = vpop.permute.xlu0 %1232
      %1234 = vrot.lane.b32.xlu0 %v1166, 20
      %v1235 = vpop.permute.xlu0 %1234
      %1236 = vrot.lane.b32.xlu0 %v1167, 20
      %v1237 = vpop.permute.xlu0 %1236
      %1238 = vrot.lane.b32.xlu0 %v1168, 20
      %v1239 = vpop.permute.xlu0 %1238
      %1240 = vrot.lane.b32.xlu0 %v1169, 20
      %v1241 = vpop.permute.xlu0 %1240
      %1242 = vrot.lane.b32.xlu0 %v1170, 20
      %v1243 = vpop.permute.xlu0 %1242
      %1244 = vrot.lane.b32.xlu0 %v1171, 20
      %v1245 = vpop.permute.xlu0 %1244
      %1246 = vrot.lane.b32.xlu0 %v1172, 20
      %v1247 = vpop.permute.xlu0 %1246
      %1248 = vrot.lane.b32.xlu0 %v1173, 20
      %v1249 = vpop.permute.xlu0 %1248
      %1250 = vrot.lane.b32.xlu0 %v1174, 20
      %v1251 = vpop.permute.xlu0 %1250
      %1252 = vrot.lane.b32.xlu0 %v1175, 20
      %v1253 = vpop.permute.xlu0 %1252
      %1254 = vrot.lane.b32.xlu0 %v1176, 20
      %v1255 = vpop.permute.xlu0 %1254
      %1256 = vrot.lane.b32.xlu0 %v1177, 20
      %v1257 = vpop.permute.xlu0 %1256
      %1258 = vrot.lane.b32.xlu0 %v1178, 20
      %v1259 = vpop.permute.xlu0 %1258
      %1260 = vrot.lane.b32.xlu0 %v1179, 20
      %v1261 = vpop.permute.xlu0 %1260
      %1262 = vrot.lane.b32.xlu0 %v1180, 20
      %v1263 = vpop.permute.xlu0 %1262
      %1264 = vrot.lane.b32.xlu0 %v1181, 20
      %v1265 = vpop.permute.xlu0 %1264
      %1266 = vrot.lane.b32.xlu0 %v1182, 20
      %v1267 = vpop.permute.xlu0 %1266
      %1268 = vrot.lane.b32.xlu0 %v1183, 20
      %v1269 = vpop.permute.xlu0 %1268
      %1270 = vrot.lane.b32.xlu0 %v1184, 20
      %v1271 = vpop.permute.xlu0 %1270
      %1272 = vrot.lane.b32.xlu0 %v1185, 20
      %v1273 = vpop.permute.xlu0 %1272
      %1274 = vrot.lane.b32.xlu0 %v1186, 20
      %v1275 = vpop.permute.xlu0 %1274
      %1276 = vrot.lane.b32.xlu0 %v1187, 20
      %v1277 = vpop.permute.xlu0 %1276
      %1278 = vrot.lane.b32.xlu0 %v1188, 20
      %v1279 = vpop.permute.xlu0 %1278
      %1280 = vrot.lane.b32.xlu0 %v1189, 20
      %v1281 = vpop.permute.xlu0 %1280
      %1282 = vrot.lane.b32.xlu0 %v1190, 20
      %v1283 = vpop.permute.xlu0 %1282
      %1284 = vrot.lane.b32.xlu0 %v1191, 20
      %v1285 = vpop.permute.xlu0 %1284
      %1286 = vrot.lane.b32.xlu0 %v1192, 20
      %v1287 = vpop.permute.xlu0 %1286
      %1288 = vrot.lane.b32.xlu0 %v1193, 20
      %v1289 = vpop.permute.xlu0 %1288
      %vm1322 = vcmask 195744
      %1323 = vst.msk [vmem:[#allocation3] sm:$0xff] %vm1322, %v1227
      %1324 = vst.msk [vmem:[#allocation3 + $0x8] sm:$0xff] %vm1322, %v1229
      %1325 = vst.msk [vmem:[#allocation3 + $0x10] sm:$0xff] %vm1322, %v1231
      %1326 = vst.msk [vmem:[#allocation3 + $0x18] sm:$0xff] %vm1322, %v1233
      %1327 = vst.msk [vmem:[#allocation3 + $0x20] sm:$0xff] %vm1322, %v1235
      %1328 = vst.msk [vmem:[#allocation3 + $0x28] sm:$0xff] %vm1322, %v1237
      %1329 = vst.msk [vmem:[#allocation3 + $0x30] sm:$0xff] %vm1322, %v1239
      %1330 = vst.msk [vmem:[#allocation3 + $0x38] sm:$0xff] %vm1322, %v1241
      %1331 = vst.msk [vmem:[#allocation3 + $0x40] sm:$0xff] %vm1322, %v1243
      %1332 = vst.msk [vmem:[#allocation3 + $0x48] sm:$0xff] %vm1322, %v1245
      %1333 = vst.msk [vmem:[#allocation3 + $0x50] sm:$0xff] %vm1322, %v1247
      %1334 = vst.msk [vmem:[#allocation3 + $0x58] sm:$0xff] %vm1322, %v1249
      %1335 = vst.msk [vmem:[#allocation3 + $0x60] sm:$0xff] %vm1322, %v1251
      %1336 = vst.msk [vmem:[#allocation3 + $0x68] sm:$0xff] %vm1322, %v1253
      %1337 = vst.msk [vmem:[#allocation3 + $0x70] sm:$0xff] %vm1322, %v1255
      %1338 = vst.msk [vmem:[#allocation3 + $0x78] sm:$0xff] %vm1322, %v1257
      %1339 = vst.msk [vmem:[#allocation3 + $0x80] sm:$0xff] %vm1322, %v1259
      %1340 = vst.msk [vmem:[#allocation3 + $0x88] sm:$0xff] %vm1322, %v1261
      %1341 = vst.msk [vmem:[#allocation3 + $0x90] sm:$0xff] %vm1322, %v1263
      %1342 = vst.msk [vmem:[#allocation3 + $0x98] sm:$0xff] %vm1322, %v1265
      %1343 = vst.msk [vmem:[#allocation3 + $0xa0] sm:$0xff] %vm1322, %v1267
      %1344 = vst.msk [vmem:[#allocation3 + $0xa8] sm:$0xff] %vm1322, %v1269
      %1345 = vst.msk [vmem:[#allocation3 + $0xb0] sm:$0xff] %vm1322, %v1271
      %1346 = vst.msk [vmem:[#allocation3 + $0xb8] sm:$0xff] %vm1322, %v1273
      %1347 = vst.msk [vmem:[#allocation3 + $0xc0] sm:$0xff] %vm1322, %v1275
      %1348 = vst.msk [vmem:[#allocation3 + $0xc8] sm:$0xff] %vm1322, %v1277
      %1349 = vst.msk [vmem:[#allocation3 + $0xd0] sm:$0xff] %vm1322, %v1279
      %1350 = vst.msk [vmem:[#allocation3 + $0xd8] sm:$0xff] %vm1322, %v1281
      %1351 = vst.msk [vmem:[#allocation3 + $0xe0] sm:$0xff] %vm1322, %v1283
      %1352 = vst.msk [vmem:[#allocation3 + $0xe8] sm:$0xff] %vm1322, %v1285
      %1353 = vst.msk [vmem:[#allocation3 + $0xf0] sm:$0xff] %vm1322, %v1287
      %1354 = vst.msk [vmem:[#allocation3 + $0xf8] sm:$0xff] %vm1322, %v1289
      %s1355 = scalar_lea.vmem [#allocation2], 32
      %v1356 = vld [vmem:[%s1355] sm:$0xff]
      %v1357 = vld [vmem:[%s1355 + $0x10] sm:$0xff]
      %v1358 = vld [vmem:[%s1355 + $0x20] sm:$0xff]
      %v1359 = vld [vmem:[%s1355 + $0x30] sm:$0xff]
      %v1360 = vld [vmem:[%s1355 + $0x40] sm:$0xff]
      %v1361 = vld [vmem:[%s1355 + $0x50] sm:$0xff]
      %v1362 = vld [vmem:[%s1355 + $0x60] sm:$0xff]
      %v1363 = vld [vmem:[%s1355 + $0x70] sm:$0xff]
      %v1364 = vld [vmem:[%s1355 + $0xa0] sm:$0xff]
      %v1365 = vld [vmem:[%s1355 + $0xb0] sm:$0xff]
      %v1366 = vld [vmem:[%s1355 + $0xc0] sm:$0xff]
      %v1367 = vld [vmem:[%s1355 + $0xd0] sm:$0xff]
      %v1368 = vld [vmem:[%s1355 + $0xe0] sm:$0xff]
      %v1369 = vld [vmem:[%s1355 + $0xf0] sm:$0xff]
      %v1370 = vld [vmem:[%s1355 + $0x100] sm:$0xff]
      %v1371 = vld [vmem:[%s1355 + $0x110] sm:$0xff]
      %v1372 = vld [vmem:[%s1355 + $0x140] sm:$0xff]
      %v1373 = vld [vmem:[%s1355 + $0x150] sm:$0xff]
      %v1374 = vld [vmem:[%s1355 + $0x160] sm:$0xff]
      %v1375 = vld [vmem:[%s1355 + $0x170] sm:$0xff]
      %v1376 = vld [vmem:[%s1355 + $0x180] sm:$0xff]
      %v1377 = vld [vmem:[%s1355 + $0x190] sm:$0xff]
      %v1378 = vld [vmem:[%s1355 + $0x1a0] sm:$0xff]
      %v1379 = vld [vmem:[%s1355 + $0x1b0] sm:$0xff]
      %v1380 = vld [vmem:[%s1355 + $0x1e0] sm:$0xff]
      %v1381 = vld [vmem:[%s1355 + $0x1f0] sm:$0xff]
      %v1382 = vld [vmem:[%s1355 + $0x200] sm:$0xff]
      %v1383 = vld [vmem:[%s1355 + $0x210] sm:$0xff]
      %v1384 = vld [vmem:[%s1355 + $0x220] sm:$0xff]
      %v1385 = vld [vmem:[%s1355 + $0x230] sm:$0xff]
      %v1386 = vld [vmem:[%s1355 + $0x240] sm:$0xff]
      %v1387 = vld [vmem:[%s1355 + $0x250] sm:$0xff]
      %1420 = vrot.lane.b32.xlu0 %v1356, 24
      %v1421 = vpop.permute.xlu0 %1420
      %1422 = vrot.lane.b32.xlu0 %v1357, 24
      %v1423 = vpop.permute.xlu0 %1422
      %1424 = vrot.lane.b32.xlu0 %v1358, 24
      %v1425 = vpop.permute.xlu0 %1424
      %1426 = vrot.lane.b32.xlu0 %v1359, 24
      %v1427 = vpop.permute.xlu0 %1426
      %1428 = vrot.lane.b32.xlu0 %v1360, 24
      %v1429 = vpop.permute.xlu0 %1428
      %1430 = vrot.lane.b32.xlu0 %v1361, 24
      %v1431 = vpop.permute.xlu0 %1430
      %1432 = vrot.lane.b32.xlu0 %v1362, 24
      %v1433 = vpop.permute.xlu0 %1432
      %1434 = vrot.lane.b32.xlu0 %v1363, 24
      %v1435 = vpop.permute.xlu0 %1434
      %1436 = vrot.lane.b32.xlu0 %v1364, 24
      %v1437 = vpop.permute.xlu0 %1436
      %1438 = vrot.lane.b32.xlu0 %v1365, 24
      %v1439 = vpop.permute.xlu0 %1438
      %1440 = vrot.lane.b32.xlu0 %v1366, 24
      %v1441 = vpop.permute.xlu0 %1440
      %1442 = vrot.lane.b32.xlu0 %v1367, 24
      %v1443 = vpop.permute.xlu0 %1442
      %1444 = vrot.lane.b32.xlu0 %v1368, 24
      %v1445 = vpop.permute.xlu0 %1444
      %1446 = vrot.lane.b32.xlu0 %v1369, 24
      %v1447 = vpop.permute.xlu0 %1446
      %1448 = vrot.lane.b32.xlu0 %v1370, 24
      %v1449 = vpop.permute.xlu0 %1448
      %1450 = vrot.lane.b32.xlu0 %v1371, 24
      %v1451 = vpop.permute.xlu0 %1450
      %1452 = vrot.lane.b32.xlu0 %v1372, 24
      %v1453 = vpop.permute.xlu0 %1452
      %1454 = vrot.lane.b32.xlu0 %v1373, 24
      %v1455 = vpop.permute.xlu0 %1454
      %1456 = vrot.lane.b32.xlu0 %v1374, 24
      %v1457 = vpop.permute.xlu0 %1456
      %1458 = vrot.lane.b32.xlu0 %v1375, 24
      %v1459 = vpop.permute.xlu0 %1458
      %1460 = vrot.lane.b32.xlu0 %v1376, 24
      %v1461 = vpop.permute.xlu0 %1460
      %1462 = vrot.lane.b32.xlu0 %v1377, 24
      %v1463 = vpop.permute.xlu0 %1462
      %1464 = vrot.lane.b32.xlu0 %v1378, 24
      %v1465 = vpop.permute.xlu0 %1464
      %1466 = vrot.lane.b32.xlu0 %v1379, 24
      %v1467 = vpop.permute.xlu0 %1466
      %1468 = vrot.lane.b32.xlu0 %v1380, 24
      %v1469 = vpop.permute.xlu0 %1468
      %1470 = vrot.lane.b32.xlu0 %v1381, 24
      %v1471 = vpop.permute.xlu0 %1470
      %1472 = vrot.lane.b32.xlu0 %v1382, 24
      %v1473 = vpop.permute.xlu0 %1472
      %1474 = vrot.lane.b32.xlu0 %v1383, 24
      %v1475 = vpop.permute.xlu0 %1474
      %1476 = vrot.lane.b32.xlu0 %v1384, 24
      %v1477 = vpop.permute.xlu0 %1476
      %1478 = vrot.lane.b32.xlu0 %v1385, 24
      %v1479 = vpop.permute.xlu0 %1478
      %1480 = vrot.lane.b32.xlu0 %v1386, 24
      %v1481 = vpop.permute.xlu0 %1480
      %1482 = vrot.lane.b32.xlu0 %v1387, 24
      %v1483 = vpop.permute.xlu0 %1482
      %vm1516 = vcmask 228544
      %1517 = vst.msk [vmem:[#allocation3] sm:$0xff] %vm1516, %v1421
      %1518 = vst.msk [vmem:[#allocation3 + $0x8] sm:$0xff] %vm1516, %v1423
      %1519 = vst.msk [vmem:[#allocation3 + $0x10] sm:$0xff] %vm1516, %v1425
      %1520 = vst.msk [vmem:[#allocation3 + $0x18] sm:$0xff] %vm1516, %v1427
      %1521 = vst.msk [vmem:[#allocation3 + $0x20] sm:$0xff] %vm1516, %v1429
      %1522 = vst.msk [vmem:[#allocation3 + $0x28] sm:$0xff] %vm1516, %v1431
      %1523 = vst.msk [vmem:[#allocation3 + $0x30] sm:$0xff] %vm1516, %v1433
      %1524 = vst.msk [vmem:[#allocation3 + $0x38] sm:$0xff] %vm1516, %v1435
      %1525 = vst.msk [vmem:[#allocation3 + $0x40] sm:$0xff] %vm1516, %v1437
      %1526 = vst.msk [vmem:[#allocation3 + $0x48] sm:$0xff] %vm1516, %v1439
      %1527 = vst.msk [vmem:[#allocation3 + $0x50] sm:$0xff] %vm1516, %v1441
      %1528 = vst.msk [vmem:[#allocation3 + $0x58] sm:$0xff] %vm1516, %v1443
      %1529 = vst.msk [vmem:[#allocation3 + $0x60] sm:$0xff] %vm1516, %v1445
      %1530 = vst.msk [vmem:[#allocation3 + $0x68] sm:$0xff] %vm1516, %v1447
      %1531 = vst.msk [vmem:[#allocation3 + $0x70] sm:$0xff] %vm1516, %v1449
      %1532 = vst.msk [vmem:[#allocation3 + $0x78] sm:$0xff] %vm1516, %v1451
      %1533 = vst.msk [vmem:[#allocation3 + $0x80] sm:$0xff] %vm1516, %v1453
      %1534 = vst.msk [vmem:[#allocation3 + $0x88] sm:$0xff] %vm1516, %v1455
      %1535 = vst.msk [vmem:[#allocation3 + $0x90] sm:$0xff] %vm1516, %v1457
      %1536 = vst.msk [vmem:[#allocation3 + $0x98] sm:$0xff] %vm1516, %v1459
      %1537 = vst.msk [vmem:[#allocation3 + $0xa0] sm:$0xff] %vm1516, %v1461
      %1538 = vst.msk [vmem:[#allocation3 + $0xa8] sm:$0xff] %vm1516, %v1463
      %1539 = vst.msk [vmem:[#allocation3 + $0xb0] sm:$0xff] %vm1516, %v1465
      %1540 = vst.msk [vmem:[#allocation3 + $0xb8] sm:$0xff] %vm1516, %v1467
      %1541 = vst.msk [vmem:[#allocation3 + $0xc0] sm:$0xff] %vm1516, %v1469
      %1542 = vst.msk [vmem:[#allocation3 + $0xc8] sm:$0xff] %vm1516, %v1471
      %1543 = vst.msk [vmem:[#allocation3 + $0xd0] sm:$0xff] %vm1516, %v1473
      %1544 = vst.msk [vmem:[#allocation3 + $0xd8] sm:$0xff] %vm1516, %v1475
      %1545 = vst.msk [vmem:[#allocation3 + $0xe0] sm:$0xff] %vm1516, %v1477
      %1546 = vst.msk [vmem:[#allocation3 + $0xe8] sm:$0xff] %vm1516, %v1479
      %1547 = vst.msk [vmem:[#allocation3 + $0xf0] sm:$0xff] %vm1516, %v1481
      %1548 = vst.msk [vmem:[#allocation3 + $0xf8] sm:$0xff] %vm1516, %v1483
      %v1549 = vld [vmem:[%s1355 + $0x1] sm:$0xff]
      %v1550 = vld [vmem:[%s1355 + $0x11] sm:$0xff]
      %v1551 = vld [vmem:[%s1355 + $0x21] sm:$0xff]
      %v1552 = vld [vmem:[%s1355 + $0x31] sm:$0xff]
      %v1553 = vld [vmem:[%s1355 + $0x41] sm:$0xff]
      %v1554 = vld [vmem:[%s1355 + $0x51] sm:$0xff]
      %v1555 = vld [vmem:[%s1355 + $0x61] sm:$0xff]
      %v1556 = vld [vmem:[%s1355 + $0x71] sm:$0xff]
      %v1557 = vld [vmem:[%s1355 + $0xa1] sm:$0xff]
      %v1558 = vld [vmem:[%s1355 + $0xb1] sm:$0xff]
      %v1559 = vld [vmem:[%s1355 + $0xc1] sm:$0xff]
      %v1560 = vld [vmem:[%s1355 + $0xd1] sm:$0xff]
      %v1561 = vld [vmem:[%s1355 + $0xe1] sm:$0xff]
      %v1562 = vld [vmem:[%s1355 + $0xf1] sm:$0xff]
      %v1563 = vld [vmem:[%s1355 + $0x101] sm:$0xff]
      %v1564 = vld [vmem:[%s1355 + $0x111] sm:$0xff]
      %v1565 = vld [vmem:[%s1355 + $0x141] sm:$0xff]
      %v1566 = vld [vmem:[%s1355 + $0x151] sm:$0xff]
      %v1567 = vld [vmem:[%s1355 + $0x161] sm:$0xff]
      %v1568 = vld [vmem:[%s1355 + $0x171] sm:$0xff]
      %v1569 = vld [vmem:[%s1355 + $0x181] sm:$0xff]
      %v1570 = vld [vmem:[%s1355 + $0x191] sm:$0xff]
      %v1571 = vld [vmem:[%s1355 + $0x1a1] sm:$0xff]
      %v1572 = vld [vmem:[%s1355 + $0x1b1] sm:$0xff]
      %v1573 = vld [vmem:[%s1355 + $0x1e1] sm:$0xff]
      %v1574 = vld [vmem:[%s1355 + $0x1f1] sm:$0xff]
      %v1575 = vld [vmem:[%s1355 + $0x201] sm:$0xff]
      %v1576 = vld [vmem:[%s1355 + $0x211] sm:$0xff]
      %v1577 = vld [vmem:[%s1355 + $0x221] sm:$0xff]
      %v1578 = vld [vmem:[%s1355 + $0x231] sm:$0xff]
      %v1579 = vld [vmem:[%s1355 + $0x241] sm:$0xff]
      %v1580 = vld [vmem:[%s1355 + $0x251] sm:$0xff]
      %1613 = vrot.lane.b32.xlu0 %v1549, 28
      %v1614 = vpop.permute.xlu0 %1613
      %1615 = vrot.lane.b32.xlu0 %v1550, 28
      %v1616 = vpop.permute.xlu0 %1615
      %1617 = vrot.lane.b32.xlu0 %v1551, 28
      %v1618 = vpop.permute.xlu0 %1617
      %1619 = vrot.lane.b32.xlu0 %v1552, 28
      %v1620 = vpop.permute.xlu0 %1619
      %1621 = vrot.lane.b32.xlu0 %v1553, 28
      %v1622 = vpop.permute.xlu0 %1621
      %1623 = vrot.lane.b32.xlu0 %v1554, 28
      %v1624 = vpop.permute.xlu0 %1623
      %1625 = vrot.lane.b32.xlu0 %v1555, 28
      %v1626 = vpop.permute.xlu0 %1625
      %1627 = vrot.lane.b32.xlu0 %v1556, 28
      %v1628 = vpop.permute.xlu0 %1627
      %1629 = vrot.lane.b32.xlu0 %v1557, 28
      %v1630 = vpop.permute.xlu0 %1629
      %1631 = vrot.lane.b32.xlu0 %v1558, 28
      %v1632 = vpop.permute.xlu0 %1631
      %1633 = vrot.lane.b32.xlu0 %v1559, 28
      %v1634 = vpop.permute.xlu0 %1633
      %1635 = vrot.lane.b32.xlu0 %v1560, 28
      %v1636 = vpop.permute.xlu0 %1635
      %1637 = vrot.lane.b32.xlu0 %v1561, 28
      %v1638 = vpop.permute.xlu0 %1637
      %1639 = vrot.lane.b32.xlu0 %v1562, 28
      %v1640 = vpop.permute.xlu0 %1639
      %1641 = vrot.lane.b32.xlu0 %v1563, 28
      %v1642 = vpop.permute.xlu0 %1641
      %1643 = vrot.lane.b32.xlu0 %v1564, 28
      %v1644 = vpop.permute.xlu0 %1643
      %1645 = vrot.lane.b32.xlu0 %v1565, 28
      %v1646 = vpop.permute.xlu0 %1645
      %1647 = vrot.lane.b32.xlu0 %v1566, 28
      %v1648 = vpop.permute.xlu0 %1647
      %1649 = vrot.lane.b32.xlu0 %v1567, 28
      %v1650 = vpop.permute.xlu0 %1649
      %1651 = vrot.lane.b32.xlu0 %v1568, 28
      %v1652 = vpop.permute.xlu0 %1651
      %1653 = vrot.lane.b32.xlu0 %v1569, 28
      %v1654 = vpop.permute.xlu0 %1653
      %1655 = vrot.lane.b32.xlu0 %v1570, 28
      %v1656 = vpop.permute.xlu0 %1655
      %1657 = vrot.lane.b32.xlu0 %v1571, 28
      %v1658 = vpop.permute.xlu0 %1657
      %1659 = vrot.lane.b32.xlu0 %v1572, 28
      %v1660 = vpop.permute.xlu0 %1659
      %1661 = vrot.lane.b32.xlu0 %v1573, 28
      %v1662 = vpop.permute.xlu0 %1661
      %1663 = vrot.lane.b32.xlu0 %v1574, 28
      %v1664 = vpop.permute.xlu0 %1663
      %1665 = vrot.lane.b32.xlu0 %v1575, 28
      %v1666 = vpop.permute.xlu0 %1665
      %1667 = vrot.lane.b32.xlu0 %v1576, 28
      %v1668 = vpop.permute.xlu0 %1667
      %1669 = vrot.lane.b32.xlu0 %v1577, 28
      %v1670 = vpop.permute.xlu0 %1669
      %1671 = vrot.lane.b32.xlu0 %v1578, 28
      %v1672 = vpop.permute.xlu0 %1671
      %1673 = vrot.lane.b32.xlu0 %v1579, 28
      %v1674 = vpop.permute.xlu0 %1673
      %1675 = vrot.lane.b32.xlu0 %v1580, 28
      %v1676 = vpop.permute.xlu0 %1675
      %vm1709 = vcmask 261344
      %1710 = vst.msk [vmem:[#allocation3] sm:$0xff] %vm1709, %v1614
      %1711 = vst.msk [vmem:[#allocation3 + $0x8] sm:$0xff] %vm1709, %v1616
      %1712 = vst.msk [vmem:[#allocation3 + $0x10] sm:$0xff] %vm1709, %v1618
      %1713 = vst.msk [vmem:[#allocation3 + $0x18] sm:$0xff] %vm1709, %v1620
      %1714 = vst.msk [vmem:[#allocation3 + $0x20] sm:$0xff] %vm1709, %v1622
      %1715 = vst.msk [vmem:[#allocation3 + $0x28] sm:$0xff] %vm1709, %v1624
      %1716 = vst.msk [vmem:[#allocation3 + $0x30] sm:$0xff] %vm1709, %v1626
      %1717 = vst.msk [vmem:[#allocation3 + $0x38] sm:$0xff] %vm1709, %v1628
      %1718 = vst.msk [vmem:[#allocation3 + $0x40] sm:$0xff] %vm1709, %v1630
      %1719 = vst.msk [vmem:[#allocation3 + $0x48] sm:$0xff] %vm1709, %v1632
      %1720 = vst.msk [vmem:[#allocation3 + $0x50] sm:$0xff] %vm1709, %v1634
      %1721 = vst.msk [vmem:[#allocation3 + $0x58] sm:$0xff] %vm1709, %v1636
      %1722 = vst.msk [vmem:[#allocation3 + $0x60] sm:$0xff] %vm1709, %v1638
      %1723 = vst.msk [vmem:[#allocation3 + $0x68] sm:$0xff] %vm1709, %v1640
      %1724 = vst.msk [vmem:[#allocation3 + $0x70] sm:$0xff] %vm1709, %v1642
      %1725 = vst.msk [vmem:[#allocation3 + $0x78] sm:$0xff] %vm1709, %v1644
      %1726 = vst.msk [vmem:[#allocation3 + $0x80] sm:$0xff] %vm1709, %v1646
      %1727 = vst.msk [vmem:[#allocation3 + $0x88] sm:$0xff] %vm1709, %v1648
      %1728 = vst.msk [vmem:[#allocation3 + $0x90] sm:$0xff] %vm1709, %v1650
      %1729 = vst.msk [vmem:[#allocation3 + $0x98] sm:$0xff] %vm1709, %v1652
      %1730 = vst.msk [vmem:[#allocation3 + $0xa0] sm:$0xff] %vm1709, %v1654
      %1731 = vst.msk [vmem:[#allocation3 + $0xa8] sm:$0xff] %vm1709, %v1656
      %1732 = vst.msk [vmem:[#allocation3 + $0xb0] sm:$0xff] %vm1709, %v1658
      %1733 = vst.msk [vmem:[#allocation3 + $0xb8] sm:$0xff] %vm1709, %v1660
      %1734 = vst.msk [vmem:[#allocation3 + $0xc0] sm:$0xff] %vm1709, %v1662
      %1735 = vst.msk [vmem:[#allocation3 + $0xc8] sm:$0xff] %vm1709, %v1664
      %1736 = vst.msk [vmem:[#allocation3 + $0xd0] sm:$0xff] %vm1709, %v1666
      %1737 = vst.msk [vmem:[#allocation3 + $0xd8] sm:$0xff] %vm1709, %v1668
      %1738 = vst.msk [vmem:[#allocation3 + $0xe0] sm:$0xff] %vm1709, %v1670
      %1739 = vst.msk [vmem:[#allocation3 + $0xe8] sm:$0xff] %vm1709, %v1672
      %1740 = vst.msk [vmem:[#allocation3 + $0xf0] sm:$0xff] %vm1709, %v1674
      %1741 = vst.msk [vmem:[#allocation3 + $0xf8] sm:$0xff] %vm1709, %v1676
      %v1742 = vld [vmem:[%s1355 + $0x2] sm:$0xff]
      %v1743 = vld [vmem:[%s1355 + $0x12] sm:$0xff]
      %v1744 = vld [vmem:[%s1355 + $0x22] sm:$0xff]
      %v1745 = vld [vmem:[%s1355 + $0x32] sm:$0xff]
      %v1746 = vld [vmem:[%s1355 + $0x42] sm:$0xff]
      %v1747 = vld [vmem:[%s1355 + $0x52] sm:$0xff]
      %v1748 = vld [vmem:[%s1355 + $0x62] sm:$0xff]
      %v1749 = vld [vmem:[%s1355 + $0x72] sm:$0xff]
      %v1750 = vld [vmem:[%s1355 + $0xa2] sm:$0xff]
      %v1751 = vld [vmem:[%s1355 + $0xb2] sm:$0xff]
      %v1752 = vld [vmem:[%s1355 + $0xc2] sm:$0xff]
      %v1753 = vld [vmem:[%s1355 + $0xd2] sm:$0xff]
      %v1754 = vld [vmem:[%s1355 + $0xe2] sm:$0xff]
      %v1755 = vld [vmem:[%s1355 + $0xf2] sm:$0xff]
      %v1756 = vld [vmem:[%s1355 + $0x102] sm:$0xff]
      %v1757 = vld [vmem:[%s1355 + $0x112] sm:$0xff]
      %v1758 = vld [vmem:[%s1355 + $0x142] sm:$0xff]
      %v1759 = vld [vmem:[%s1355 + $0x152] sm:$0xff]
      %v1760 = vld [vmem:[%s1355 + $0x162] sm:$0xff]
      %v1761 = vld [vmem:[%s1355 + $0x172] sm:$0xff]
      %v1762 = vld [vmem:[%s1355 + $0x182] sm:$0xff]
      %v1763 = vld [vmem:[%s1355 + $0x192] sm:$0xff]
      %v1764 = vld [vmem:[%s1355 + $0x1a2] sm:$0xff]
      %v1765 = vld [vmem:[%s1355 + $0x1b2] sm:$0xff]
      %v1766 = vld [vmem:[%s1355 + $0x1e2] sm:$0xff]
      %v1767 = vld [vmem:[%s1355 + $0x1f2] sm:$0xff]
      %v1768 = vld [vmem:[%s1355 + $0x202] sm:$0xff]
      %v1769 = vld [vmem:[%s1355 + $0x212] sm:$0xff]
      %v1770 = vld [vmem:[%s1355 + $0x222] sm:$0xff]
      %v1771 = vld [vmem:[%s1355 + $0x232] sm:$0xff]
      %v1772 = vld [vmem:[%s1355 + $0x242] sm:$0xff]
      %v1773 = vld [vmem:[%s1355 + $0x252] sm:$0xff]
      %1806 = vrot.lane.b32.xlu0 %v1742, 32
      %v1807 = vpop.permute.xlu0 %1806
      %1808 = vrot.lane.b32.xlu0 %v1743, 32
      %v1809 = vpop.permute.xlu0 %1808
      %1810 = vrot.lane.b32.xlu0 %v1744, 32
      %v1811 = vpop.permute.xlu0 %1810
      %1812 = vrot.lane.b32.xlu0 %v1745, 32
      %v1813 = vpop.permute.xlu0 %1812
      %1814 = vrot.lane.b32.xlu0 %v1746, 32
      %v1815 = vpop.permute.xlu0 %1814
      %1816 = vrot.lane.b32.xlu0 %v1747, 32
      %v1817 = vpop.permute.xlu0 %1816
      %1818 = vrot.lane.b32.xlu0 %v1748, 32
      %v1819 = vpop.permute.xlu0 %1818
      %1820 = vrot.lane.b32.xlu0 %v1749, 32
      %v1821 = vpop.permute.xlu0 %1820
      %1822 = vrot.lane.b32.xlu0 %v1750, 32
      %v1823 = vpop.permute.xlu0 %1822
      %1824 = vrot.lane.b32.xlu0 %v1751, 32
      %v1825 = vpop.permute.xlu0 %1824
      %1826 = vrot.lane.b32.xlu0 %v1752, 32
      %v1827 = vpop.permute.xlu0 %1826
      %1828 = vrot.lane.b32.xlu0 %v1753, 32
      %v1829 = vpop.permute.xlu0 %1828
      %1830 = vrot.lane.b32.xlu0 %v1754, 32
      %v1831 = vpop.permute.xlu0 %1830
      %1832 = vrot.lane.b32.xlu0 %v1755, 32
      %v1833 = vpop.permute.xlu0 %1832
      %1834 = vrot.lane.b32.xlu0 %v1756, 32
      %v1835 = vpop.permute.xlu0 %1834
      %1836 = vrot.lane.b32.xlu0 %v1757, 32
      %v1837 = vpop.permute.xlu0 %1836
      %1838 = vrot.lane.b32.xlu0 %v1758, 32
      %v1839 = vpop.permute.xlu0 %1838
      %1840 = vrot.lane.b32.xlu0 %v1759, 32
      %v1841 = vpop.permute.xlu0 %1840
      %1842 = vrot.lane.b32.xlu0 %v1760, 32
      %v1843 = vpop.permute.xlu0 %1842
      %1844 = vrot.lane.b32.xlu0 %v1761, 32
      %v1845 = vpop.permute.xlu0 %1844
      %1846 = vrot.lane.b32.xlu0 %v1762, 32
      %v1847 = vpop.permute.xlu0 %1846
      %1848 = vrot.lane.b32.xlu0 %v1763, 32
      %v1849 = vpop.permute.xlu0 %1848
      %1850 = vrot.lane.b32.xlu0 %v1764, 32
      %v1851 = vpop.permute.xlu0 %1850
      %1852 = vrot.lane.b32.xlu0 %v1765, 32
      %v1853 = vpop.permute.xlu0 %1852
      %1854 = vrot.lane.b32.xlu0 %v1766, 32
      %v1855 = vpop.permute.xlu0 %1854
      %1856 = vrot.lane.b32.xlu0 %v1767, 32
      %v1857 = vpop.permute.xlu0 %1856
      %1858 = vrot.lane.b32.xlu0 %v1768, 32
      %v1859 = vpop.permute.xlu0 %1858
      %1860 = vrot.lane.b32.xlu0 %v1769, 32
      %v1861 = vpop.permute.xlu0 %1860
      %1862 = vrot.lane.b32.xlu0 %v1770, 32
      %v1863 = vpop.permute.xlu0 %1862
      %1864 = vrot.lane.b32.xlu0 %v1771, 32
      %v1865 = vpop.permute.xlu0 %1864
      %1866 = vrot.lane.b32.xlu0 %v1772, 32
      %v1867 = vpop.permute.xlu0 %1866
      %1868 = vrot.lane.b32.xlu0 %v1773, 32
      %v1869 = vpop.permute.xlu0 %1868
      %vm1902 = vcmask 294144
      %1903 = vst.msk [vmem:[#allocation3] sm:$0xff] %vm1902, %v1807
      %1904 = vst.msk [vmem:[#allocation3 + $0x8] sm:$0xff] %vm1902, %v1809
      %1905 = vst.msk [vmem:[#allocation3 + $0x10] sm:$0xff] %vm1902, %v1811
      %1906 = vst.msk [vmem:[#allocation3 + $0x18] sm:$0xff] %vm1902, %v1813
      %1907 = vst.msk [vmem:[#allocation3 + $0x20] sm:$0xff] %vm1902, %v1815
      %1908 = vst.msk [vmem:[#allocation3 + $0x28] sm:$0xff] %vm1902, %v1817
      %1909 = vst.msk [vmem:[#allocation3 + $0x30] sm:$0xff] %vm1902, %v1819
      %1910 = vst.msk [vmem:[#allocation3 + $0x38] sm:$0xff] %vm1902, %v1821
      %1911 = vst.msk [vmem:[#allocation3 + $0x40] sm:$0xff] %vm1902, %v1823
      %1912 = vst.msk [vmem:[#allocation3 + $0x48] sm:$0xff] %vm1902, %v1825
      %1913 = vst.msk [vmem:[#allocation3 + $0x50] sm:$0xff] %vm1902, %v1827
      %1914 = vst.msk [vmem:[#allocation3 + $0x58] sm:$0xff] %vm1902, %v1829
      %1915 = vst.msk [vmem:[#allocation3 + $0x60] sm:$0xff] %vm1902, %v1831
      %1916 = vst.msk [vmem:[#allocation3 + $0x68] sm:$0xff] %vm1902, %v1833
      %1917 = vst.msk [vmem:[#allocation3 + $0x70] sm:$0xff] %vm1902, %v1835
      %1918 = vst.msk [vmem:[#allocation3 + $0x78] sm:$0xff] %vm1902, %v1837
      %1919 = vst.msk [vmem:[#allocation3 + $0x80] sm:$0xff] %vm1902, %v1839
      %1920 = vst.msk [vmem:[#allocation3 + $0x88] sm:$0xff] %vm1902, %v1841
      %1921 = vst.msk [vmem:[#allocation3 + $0x90] sm:$0xff] %vm1902, %v1843
      %1922 = vst.msk [vmem:[#allocation3 + $0x98] sm:$0xff] %vm1902, %v1845
      %1923 = vst.msk [vmem:[#allocation3 + $0xa0] sm:$0xff] %vm1902, %v1847
      %1924 = vst.msk [vmem:[#allocation3 + $0xa8] sm:$0xff] %vm1902, %v1849
      %1925 = vst.msk [vmem:[#allocation3 + $0xb0] sm:$0xff] %vm1902, %v1851
      %1926 = vst.msk [vmem:[#allocation3 + $0xb8] sm:$0xff] %vm1902, %v1853
      %1927 = vst.msk [vmem:[#allocation3 + $0xc0] sm:$0xff] %vm1902, %v1855
      %1928 = vst.msk [vmem:[#allocation3 + $0xc8] sm:$0xff] %vm1902, %v1857
      %1929 = vst.msk [vmem:[#allocation3 + $0xd0] sm:$0xff] %vm1902, %v1859
      %1930 = vst.msk [vmem:[#allocation3 + $0xd8] sm:$0xff] %vm1902, %v1861
      %1931 = vst.msk [vmem:[#allocation3 + $0xe0] sm:$0xff] %vm1902, %v1863
      %1932 = vst.msk [vmem:[#allocation3 + $0xe8] sm:$0xff] %vm1902, %v1865
      %1933 = vst.msk [vmem:[#allocation3 + $0xf0] sm:$0xff] %vm1902, %v1867
      %1934 = vst.msk [vmem:[#allocation3 + $0xf8] sm:$0xff] %vm1902, %v1869
      %v1935 = vld [vmem:[#allocation3] sm:$0xff]
      %v1936 = vld [vmem:[#allocation3 + $0x8] sm:$0xff]
      %v1937 = vld [vmem:[#allocation3 + $0x10] sm:$0xff]
      %v1938 = vld [vmem:[#allocation3 + $0x18] sm:$0xff]
      %v1939 = vld [vmem:[#allocation3 + $0x20] sm:$0xff]
      %v1940 = vld [vmem:[#allocation3 + $0x28] sm:$0xff]
      %v1941 = vld [vmem:[#allocation3 + $0x30] sm:$0xff]
      %v1942 = vld [vmem:[#allocation3 + $0x38] sm:$0xff]
      %v1943 = vld [vmem:[#allocation3 + $0x40] sm:$0xff]
      %v1944 = vld [vmem:[#allocation3 + $0x48] sm:$0xff]
      %v1945 = vld [vmem:[#allocation3 + $0x50] sm:$0xff]
      %v1946 = vld [vmem:[#allocation3 + $0x58] sm:$0xff]
      %v1947 = vld [vmem:[#allocation3 + $0x60] sm:$0xff]
      %v1948 = vld [vmem:[#allocation3 + $0x68] sm:$0xff]
      %v1949 = vld [vmem:[#allocation3 + $0x70] sm:$0xff]
      %v1950 = vld [vmem:[#allocation3 + $0x78] sm:$0xff]
      %v1951 = vld [vmem:[#allocation3 + $0x80] sm:$0xff]
      %v1952 = vld [vmem:[#allocation3 + $0x88] sm:$0xff]
      %v1953 = vld [vmem:[#allocation3 + $0x90] sm:$0xff]
      %v1954 = vld [vmem:[#allocation3 + $0x98] sm:$0xff]
      %v1955 = vld [vmem:[#allocation3 + $0xa0] sm:$0xff]
      %v1956 = vld [vmem:[#allocation3 + $0xa8] sm:$0xff]
      %v1957 = vld [vmem:[#allocation3 + $0xb0] sm:$0xff]
      %v1958 = vld [vmem:[#allocation3 + $0xb8] sm:$0xff]
      %v1959 = vld [vmem:[#allocation3 + $0xc0] sm:$0xff]
      %v1960 = vld [vmem:[#allocation3 + $0xc8] sm:$0xff]
      %v1961 = vld [vmem:[#allocation3 + $0xd0] sm:$0xff]
      %v1962 = vld [vmem:[#allocation3 + $0xd8] sm:$0xff]
      %v1963 = vld [vmem:[#allocation3 + $0xe0] sm:$0xff]
      %v1964 = vld [vmem:[#allocation3 + $0xe8] sm:$0xff]
      %v1965 = vld [vmem:[#allocation3 + $0xf0] sm:$0xff]
      %v1966 = vld [vmem:[#allocation3 + $0xf8] sm:$0xff]
      %v1967 = vld [vmem:[%s1] sm:$0xff]
      %v1968 = vld [vmem:[%s1 + $0x8] sm:$0xff]
      %v1969 = vld [vmem:[%s1 + $0x10] sm:$0xff]
      %v1970 = vld [vmem:[%s1 + $0x18] sm:$0xff]
      %v1971 = vld [vmem:[%s1 + $0x20] sm:$0xf]
      %v1972 = vld [vmem:[%s2] sm:$0x1]
      %v1974 = vperm.slane %v1972, 0
      %vm1976 = vcmask 293888
      %v1978 = vsel %vm1976, %v1935, 0
      %v1981 = vsel %vm1976, %v1936, 0
      %v1984 = vsel %vm1976, %v1937, 0
      %v1987 = vsel %vm1976, %v1938, 0
      %v1990 = vsel %vm1976, %v1939, 0
      %v1993 = vsel %vm1976, %v1940, 0
      %v1996 = vsel %vm1976, %v1941, 0
      %v1999 = vsel %vm1976, %v1942, 0
      %v2002 = vsel %vm1976, %v1943, 0
      %v2005 = vsel %vm1976, %v1944, 0
      %v2008 = vsel %vm1976, %v1945, 0
      %v2011 = vsel %vm1976, %v1946, 0
      %v2014 = vsel %vm1976, %v1947, 0
      %v2017 = vsel %vm1976, %v1948, 0
      %v2020 = vsel %vm1976, %v1949, 0
      %v2023 = vsel %vm1976, %v1950, 0
      %v2026 = vsel %vm1976, %v1951, 0
      %v2029 = vsel %vm1976, %v1952, 0
      %v2032 = vsel %vm1976, %v1953, 0
      %v2035 = vsel %vm1976, %v1954, 0
      %v2038 = vsel %vm1976, %v1955, 0
      %v2041 = vsel %vm1976, %v1956, 0
      %v2044 = vsel %vm1976, %v1957, 0
      %v2047 = vsel %vm1976, %v1958, 0
      %v2050 = vsel %vm1976, %v1959, 0
      %v2053 = vsel %vm1976, %v1960, 0
      %v2056 = vsel %vm1976, %v1961, 0
      %v2059 = vsel %vm1976, %v1962, 0
      %v2062 = vsel %vm1976, %v1963, 0
      %v2065 = vsel %vm1976, %v1964, 0
      %v2068 = vsel %vm1976, %v1965, 0
      %v2071 = vsel %vm1976, %v1966, 0
      %vm2073 = vcmask 1043456
      %v2075 = vsel %vm2073, %v1971, 0
      %2077 = vmatpush.msra.mxu0 0.0
      %2078 = vmatpush.msra.mxu0 0.0
      %2079 = vmatpush.msra.mxu0 0.0
      %2080 = vmatpush.msra.mxu0 0.0
      %2081 = vmatpush.msra.mxu0 0.0
      %2082 = vmatpush.msra.mxu0 0.0
      %2083 = vmatpush.msra.mxu0 0.0
      %2084 = vmatpush.msra.mxu0 0.0
      %2085 = vmatpush.msra.mxu0 0.0
      %2086 = vmatpush.msra.mxu0 0.0
      %2087 = vmatpush.msra.mxu0 0.0
      %2088 = vmatpush.msra.mxu0 %v2075
      %2089 = vmatpush.msra.mxu0 %v1970
      %2090 = vmatpush.msra.mxu0 %v1969
      %2091 = vmatpush.msra.mxu0 %v1968
      %2092 = vmatpush.msra.mxu0 %v1967
      %2093 = vmatmul.f32.gmra.mxu0 %v1978
      %v2094 = vpop.f32.mrf.mxu0
      %v2095 = vadd.f32 %v1974, %v2094
      %2096 = vmatmul.f32.gmra.mxu0 %v1981
      %v2097 = vpop.f32.mrf.mxu0
      %v2098 = vadd.f32 %v1974, %v2097
      %2099 = vmatmul.f32.gmra.mxu0 %v1984
      %v2100 = vpop.f32.mrf.mxu0
      %v2101 = vadd.f32 %v1974, %v2100
      %2102 = vmatmul.f32.gmra.mxu0 %v1987
      %v2103 = vpop.f32.mrf.mxu0
      %v2104 = vadd.f32 %v1974, %v2103
      %2105 = vmatmul.f32.gmra.mxu0 %v1990
      %v2106 = vpop.f32.mrf.mxu0
      %v2107 = vadd.f32 %v1974, %v2106
      %2108 = vmatmul.f32.gmra.mxu0 %v1993
      %v2109 = vpop.f32.mrf.mxu0
      %v2110 = vadd.f32 %v1974, %v2109
      %2111 = vmatmul.f32.gmra.mxu0 %v1996
      %v2112 = vpop.f32.mrf.mxu0
      %v2113 = vadd.f32 %v1974, %v2112
      %2114 = vmatmul.f32.gmra.mxu0 %v1999
      %v2115 = vpop.f32.mrf.mxu0
      %v2116 = vadd.f32 %v1974, %v2115
      %2117 = vmatmul.f32.gmra.mxu0 %v2002
      %v2118 = vpop.f32.mrf.mxu0
      %v2119 = vadd.f32 %v1974, %v2118
      %2120 = vmatmul.f32.gmra.mxu0 %v2005
      %v2121 = vpop.f32.mrf.mxu0
      %v2122 = vadd.f32 %v1974, %v2121
      %2123 = vmatmul.f32.gmra.mxu0 %v2008
      %v2124 = vpop.f32.mrf.mxu0
      %v2125 = vadd.f32 %v1974, %v2124
      %2126 = vmatmul.f32.gmra.mxu0 %v2011
      %v2127 = vpop.f32.mrf.mxu0
      %v2128 = vadd.f32 %v1974, %v2127
      %2129 = vmatmul.f32.gmra.mxu0 %v2014
      %v2130 = vpop.f32.mrf.mxu0
      %v2131 = vadd.f32 %v1974, %v2130
      %2132 = vmatmul.f32.gmra.mxu0 %v2017
      %v2133 = vpop.f32.mrf.mxu0
      %v2134 = vadd.f32 %v1974, %v2133
      %2135 = vmatmul.f32.gmra.mxu0 %v2020
      %v2136 = vpop.f32.mrf.mxu0
      %v2137 = vadd.f32 %v1974, %v2136
      %2138 = vmatmul.f32.gmra.mxu0 %v2023
      %v2139 = vpop.f32.mrf.mxu0
      %v2140 = vadd.f32 %v1974, %v2139
      %2141 = vmatmul.f32.gmra.mxu0 %v2026
      %v2142 = vpop.f32.mrf.mxu0
      %v2143 = vadd.f32 %v1974, %v2142
      %2144 = vmatmul.f32.gmra.mxu0 %v2029
      %v2145 = vpop.f32.mrf.mxu0
      %v2146 = vadd.f32 %v1974, %v2145
      %2147 = vmatmul.f32.gmra.mxu0 %v2032
      %v2148 = vpop.f32.mrf.mxu0
      %v2149 = vadd.f32 %v1974, %v2148
      %2150 = vmatmul.f32.gmra.mxu0 %v2035
      %v2151 = vpop.f32.mrf.mxu0
      %v2152 = vadd.f32 %v1974, %v2151
      %2153 = vmatmul.f32.gmra.mxu0 %v2038
      %v2154 = vpop.f32.mrf.mxu0
      %v2155 = vadd.f32 %v1974, %v2154
      %2156 = vmatmul.f32.gmra.mxu0 %v2041
      %v2157 = vpop.f32.mrf.mxu0
      %v2158 = vadd.f32 %v1974, %v2157
      %2159 = vmatmul.f32.gmra.mxu0 %v2044
      %v2160 = vpop.f32.mrf.mxu0
      %v2161 = vadd.f32 %v1974, %v2160
      %2162 = vmatmul.f32.gmra.mxu0 %v2047
      %v2163 = vpop.f32.mrf.mxu0
      %v2164 = vadd.f32 %v1974, %v2163
      %2165 = vmatmul.f32.gmra.mxu0 %v2050
      %v2166 = vpop.f32.mrf.mxu0
      %v2167 = vadd.f32 %v1974, %v2166
      %2168 = vmatmul.f32.gmra.mxu0 %v2053
      %v2169 = vpop.f32.mrf.mxu0
      %v2170 = vadd.f32 %v1974, %v2169
      %2171 = vmatmul.f32.gmra.mxu0 %v2056
      %v2172 = vpop.f32.mrf.mxu0
      %v2173 = vadd.f32 %v1974, %v2172
      %2174 = vmatmul.f32.gmra.mxu0 %v2059
      %v2175 = vpop.f32.mrf.mxu0
      %v2176 = vadd.f32 %v1974, %v2175
      %2177 = vmatmul.f32.gmra.mxu0 %v2062
      %v2178 = vpop.f32.mrf.mxu0
      %v2179 = vadd.f32 %v1974, %v2178
      %2180 = vmatmul.f32.gmra.mxu0 %v2065
      %v2181 = vpop.f32.mrf.mxu0
      %v2182 = vadd.f32 %v1974, %v2181
      %2183 = vmatmul.f32.gmra.mxu0 %v2068
      %v2184 = vpop.f32.mrf.mxu0
      %v2185 = vadd.f32 %v1974, %v2184
      %2186 = vmatmul.f32.gmra.mxu0 %v2071
      %v2187 = vpop.f32.mrf.mxu0
      %v2188 = vadd.f32 %v1974, %v2187
      %2189 = vdwg.mxu0
      %vm2190 = vcmask 130048
      %2191 = vst.msk [vmem:[%s177] sm:$0xff] %vm2190, %v2095
      %2192 = vst.msk [vmem:[%s177 + $0x8] sm:$0xff] %vm2190, %v2098
      %2193 = vst.msk [vmem:[%s177 + $0x10] sm:$0xff] %vm2190, %v2101
      %2194 = vst.msk [vmem:[%s177 + $0x18] sm:$0xff] %vm2190, %v2104
      %2195 = vst.msk [vmem:[%s177 + $0x20] sm:$0xff] %vm2190, %v2107
      %2196 = vst.msk [vmem:[%s177 + $0x28] sm:$0xff] %vm2190, %v2110
      %2197 = vst.msk [vmem:[%s177 + $0x30] sm:$0xff] %vm2190, %v2113
      %2198 = vst.msk [vmem:[%s177 + $0x38] sm:$0xff] %vm2190, %v2116
      %2199 = vst.msk [vmem:[%s177 + $0x40] sm:$0xff] %vm2190, %v2119
      %2200 = vst.msk [vmem:[%s177 + $0x48] sm:$0xff] %vm2190, %v2122
      %2201 = vst.msk [vmem:[%s177 + $0x50] sm:$0xff] %vm2190, %v2125
      %2202 = vst.msk [vmem:[%s177 + $0x58] sm:$0xff] %vm2190, %v2128
      %2203 = vst.msk [vmem:[%s177 + $0x60] sm:$0xff] %vm2190, %v2131
      %2204 = vst.msk [vmem:[%s177 + $0x68] sm:$0xff] %vm2190, %v2134
      %2205 = vst.msk [vmem:[%s177 + $0x70] sm:$0xff] %vm2190, %v2137
      %2206 = vst.msk [vmem:[%s177 + $0x78] sm:$0xff] %vm2190, %v2140
      %2207 = vst.msk [vmem:[%s177 + $0x80] sm:$0xff] %vm2190, %v2143
      %2208 = vst.msk [vmem:[%s177 + $0x88] sm:$0xff] %vm2190, %v2146
      %2209 = vst.msk [vmem:[%s177 + $0x90] sm:$0xff] %vm2190, %v2149
      %2210 = vst.msk [vmem:[%s177 + $0x98] sm:$0xff] %vm2190, %v2152
      %2211 = vst.msk [vmem:[%s177 + $0xa0] sm:$0xff] %vm2190, %v2155
      %2212 = vst.msk [vmem:[%s177 + $0xa8] sm:$0xff] %vm2190, %v2158
      %2213 = vst.msk [vmem:[%s177 + $0xb0] sm:$0xff] %vm2190, %v2161
      %2214 = vst.msk [vmem:[%s177 + $0xb8] sm:$0xff] %vm2190, %v2164
      %2215 = vst.msk [vmem:[%s177 + $0xc0] sm:$0xff] %vm2190, %v2167
      %2216 = vst.msk [vmem:[%s177 + $0xc8] sm:$0xff] %vm2190, %v2170
      %2217 = vst.msk [vmem:[%s177 + $0xd0] sm:$0xff] %vm2190, %v2173
      %2218 = vst.msk [vmem:[%s177 + $0xd8] sm:$0xff] %vm2190, %v2176
      %2219 = vst.msk [vmem:[%s177 + $0xe0] sm:$0xff] %vm2190, %v2179
      %2220 = vst.msk [vmem:[%s177 + $0xe8] sm:$0xff] %vm2190, %v2182
      %2221 = vst.msk [vmem:[%s177 + $0xf0] sm:$0xff] %vm2190, %v2185
      %2222 = vst.msk [vmem:[%s177 + $0xf8] sm:$0xff] %vm2190, %v2188
      %s2223 = smul.u32 4, %s14
      %p2224 = scmp.lt.s32.totalorder %s2223, 7
      %s2225 = scalar_select %p2224, %s2223, 7
      %s2226 = smul.addr %s2225, 8
      %s2227 = smul.addr %s2226, 8
      %s2228 = scalar_lea.vmem %s3, %s2227
      // Predicated region
      $region33: #{spatial_upsample2x.1} parent=31 // pred_check
        %p2229 = pneg %p100
      $region34: #{spatial_upsample2x.1} parent=31 // pred_check_branch
        %2231 = sbr.rel (%p2229) target = $region36
      $region35: #{spatial_upsample2x.1} parent=31 // pred_region
        %s2232 = smul.u32 4, %s14
      $region36: #{spatial_upsample2x.1} parent=31 // pred_fallthru
        _
    $region32: #{spatial_upsample2x.1} parent=5 // pred_fallthru
      _
    %p2233 = scmp.le.s32.totalorder 2, %s9
    // Predicated region
    $region37: #{spatial_upsample2x.1} parent=5 // pred_check
      %p2234 = pneg %p2233
    $region38: #{spatial_upsample2x.1} parent=5 // pred_check_branch
      %2236 = sbr.rel (%p2234) target = $region40
    $region39: #{spatial_upsample2x.1} parent=5 // pred_region
      %s2237 = ssub.s32 %s9, 2
      // Predicated region
      $region41: #{spatial_upsample2x.1} parent=39 // pred_check
        %p2238 = pneg %p106
      $region42: #{spatial_upsample2x.1} parent=39 // pred_check_branch
        %2240 = sbr.rel (%p2238) target = $region44
      $region43: #{spatial_upsample2x.1} parent=39 // pred_region
        %s2241 = smul.u32 4, %s15
        %p2242 = scmp.lt.s32.totalorder %s2241, 7
        %s2243 = scalar_select %p2242, %s2241, 7
        %s2244 = smul.addr %s2243, 8
        %s2245 = smul.addr %s2244, 8
        %s2246 = scalar_lea.vmem %s3, %s2245
      $region44: #{spatial_upsample2x.1} parent=39 // pred_fallthru
        _
    $region40: #{spatial_upsample2x.1} parent=5 // pred_fallthru
      _
  $region6: #{spatial_upsample2x.1} parent=0 // loop_footer
    %s13 = sadd.s32 1, %s9
  $region7: #{spatial_upsample2x.1} parent=0 // loop_footer_branch
    %8 = sbr.rel target = $region3
  $region8: #{spatial_upsample2x.1} parent=0 // loop_exit
    _

</llo_original>
